<compile_context>
chip_gen: v7x
topology: tpu7x:2x2x1
jax: 0.10.0
libtpu: 0.0.40
codegen_flags: <defaults>
</compile_context>

<pallas_src>
import math
from functools import partial

import jax
import jax.numpy as jnp
from jax.experimental import pallas as pl
from jax.experimental.pallas import tpu as pltpu


# ----------------------------------------------------------------------------
# Tiling helpers
# ----------------------------------------------------------------------------
def _row_tile(m, target=256):
    # Sublane (row) tile: full dim if small, else a 256-row slab (8-aligned).
    return m if m <= target else target


def _col_tile(n, target=256):
    # Lane (output-feature) tile: full dim if small, else 256 (128-aligned).
    return n if n <= target else target


def _k_tile(k, target=512, align=128):
    # Reduction tile must divide K exactly (a padded K block would corrupt the sum).
    if k <= target:
        return k
    t = (target // align) * align
    while t >= align:
        if k % t == 0:
            return t
        t -= align
    return k


# ----------------------------------------------------------------------------
# Pallas kernels
# ----------------------------------------------------------------------------
def _linear_kernel(x_ref, w_ref, b_ref, o_ref, acc_ref, *, relu):
    """One (tm, tn) output tile; K is the last ('arbitrary') grid axis."""
    @pl.when(pl.program_id(2) == 0)
    def _init():
        acc_ref[...] = jnp.zeros_like(acc_ref)

    acc_ref[...] += jnp.dot(x_ref[...], w_ref[...],
                            preferred_element_type=jnp.float32)

    @pl.when(pl.program_id(2) == pl.num_programs(2) - 1)
    def _store():
        y = acc_ref[...] + b_ref[...]
        if relu:
            y = jnp.maximum(y, 0.0)
        o_ref[...] = y.astype(o_ref.dtype)


def _attn_core_kernel(q_ref, k_ref, v_ref, m_ref, o_ref, *, heads, hd, neg):
    """One batch element, all heads, on lane-dense (L, E) slabs.

    q is pre-scaled (1/sqrt(embed_size) folded into Wq), so the scores equal the
    reference energy/sqrt(E); masked entries get `neg` == -1e28/sqrt(E), i.e. exactly
    the reference masked_fill(-1e28) followed by the scale.
    """
    masked = m_ref[...] == 0.0                      # (Lq, Lk)
    for h in range(heads):                          # heads is small & static
        sl = slice(h * hd, (h + 1) * hd)
        qh = q_ref[:, sl]                           # (Lq, hd)
        kh = k_ref[:, sl]                           # (Lk, hd)
        vh = v_ref[:, sl]                           # (Lk, hd)
        s = jax.lax.dot_general(qh, kh, (((1,), (1,)), ((), ())),
                                preferred_element_type=jnp.float32)  # (Lq, Lk)
        s = jnp.where(masked, neg, s)
        s = s - jnp.max(s, axis=-1, keepdims=True)
        p = jnp.exp(s)
        p = p * pl.reciprocal(jnp.sum(p, axis=-1, keepdims=True), approx=True)
        o_ref[:, sl] = jnp.dot(p, vh, preferred_element_type=jnp.float32)
    # TODO(synk): at long sequence lengths switch to flash-style (tq, tk) tiling with
    # online-softmax scratch so the (Lq, Lk) score matrix never materializes in VMEM.


def _proj_res_ln_kernel(a_ref, r_ref, w_ref, b_ref, g_ref, beta_ref, o_ref):
    """LayerNorm(a @ W + b + r) over the feature (lane) axis, eps = 1e-5."""
    y = jnp.dot(a_ref[...], w_ref[...], preferred_element_type=jnp.float32)
    z = y + b_ref[...] + r_ref[...]
    mu = jnp.mean(z, axis=-1, keepdims=True)
    zc = z - mu
    var = jnp.mean(zc * zc, axis=-1, keepdims=True)
    o_ref[...] = zc * jax.lax.rsqrt(var + 1e-5) * g_ref[...] + beta_ref[...]


def _mlp_res_ln_kernel(x_ref, w1_ref, b1_ref, w2_ref, b2_ref, g_ref, beta_ref, o_ref):
    """LayerNorm(relu(x@W1+b1)@W2 + b2 + x); the wide hidden stays on-chip."""
    x = x_ref[...]
    h = jnp.dot(x, w1_ref[...], preferred_element_type=jnp.float32) + b1_ref[...]
    h = jnp.maximum(h, 0.0)
    z = jnp.dot(h, w2_ref[...], preferred_element_type=jnp.float32) + b2_ref[...] + x
    mu = jnp.mean(z, axis=-1, keepdims=True)
    zc = z - mu
    var = jnp.mean(zc * zc, axis=-1, keepdims=True)
    o_ref[...] = zc * jax.lax.rsqrt(var + 1e-5) * g_ref[...] + beta_ref[...]


# ----------------------------------------------------------------------------
# Pallas wrappers
# ----------------------------------------------------------------------------
def linear(x, w, b=None, relu=False):
    """x: (..., K), w: (K, OUT) pre-transposed, b: (1, OUT) -> (..., OUT)."""
    lead = x.shape[:-1]
    K = x.shape[-1]
    OUT = w.shape[1]
    x2 = x.reshape(-1, K)
    M = x2.shape[0]
    if b is None:
        b = jnp.zeros((1, OUT), jnp.float32)
    tm, tn, tk = _row_tile(M), _col_tile(OUT), _k_tile(K)
    grid = (pl.cdiv(M, tm), pl.cdiv(OUT, tn), K // tk)
    y = pl.pallas_call(
        partial(_linear_kernel, relu=relu),
        grid=grid,
        in_specs=[
            pl.BlockSpec((tm, tk), lambda i, j, k: (i, k)),
            pl.BlockSpec((tk, tn), lambda i, j, k: (k, j)),
            pl.BlockSpec((1, tn), lambda i, j, k: (0, j)),
        ],
        out_specs=pl.BlockSpec((tm, tn), lambda i, j, k: (i, j)),
        out_shape=jax.ShapeDtypeStruct((M, OUT), jnp.float32),
        scratch_shapes=[pltpu.VMEM((tm, tn), jnp.float32)],
        compiler_params=pltpu.CompilerParams(
            dimension_semantics=("parallel", "parallel", "arbitrary")),
    )(x2, w, b)
    return y.reshape(*lead, OUT)


def attention_core(q, k, v, mask, *, heads, embed_size):
    """q: (N, Lq, E) projected+pre-scaled; k, v: (N, Lk, E) projected;
    mask: (N, Lq, Lk) with 0 == masked.  Returns (N, Lq, E) head-concat context."""
    N, Lq, E = q.shape
    Lk = k.shape[1]
    hd = E // heads
    neg = -1e28 / math.sqrt(embed_size)
    return pl.pallas_call(
        partial(_attn_core_kernel, heads=heads, hd=hd, neg=neg),
        grid=(N,),
        in_specs=[
            pl.BlockSpec((None, Lq, E), lambda n: (n, 0, 0)),
            pl.BlockSpec((None, Lk, E), lambda n: (n, 0, 0)),
            pl.BlockSpec((None, Lk, E), lambda n: (n, 0, 0)),
            pl.BlockSpec((None, Lq, Lk), lambda n: (n, 0, 0)),
        ],
        out_specs=pl.BlockSpec((None, Lq, E), lambda n: (n, 0, 0)),
        out_shape=jax.ShapeDtypeStruct((N, Lq, E), jnp.float32),
        compiler_params=pltpu.CompilerParams(dimension_semantics=("parallel",)),
    )(q, k, v, mask)


def proj_residual_ln(a, resid, w, b, gamma, beta):
    """LayerNorm(a @ w + b + resid); a, resid: (N, L, E); w: (E, E)."""
    lead = a.shape[:-1]
    E = a.shape[-1]
    a2 = a.reshape(-1, E)
    r2 = resid.reshape(-1, E)
    M = a2.shape[0]
    tm = _row_tile(M)
    y = pl.pallas_call(
        _proj_res_ln_kernel,
        grid=(pl.cdiv(M, tm),),
        in_specs=[
            pl.BlockSpec((tm, E), lambda i: (i, 0)),
            pl.BlockSpec((tm, E), lambda i: (i, 0)),
            pl.BlockSpec((E, E), lambda i: (0, 0)),
            pl.BlockSpec((1, E), lambda i: (0, 0)),
            pl.BlockSpec((1, E), lambda i: (0, 0)),
            pl.BlockSpec((1, E), lambda i: (0, 0)),
        ],
        out_specs=pl.BlockSpec((tm, E), lambda i: (i, 0)),
        out_shape=jax.ShapeDtypeStruct((M, E), jnp.float32),
        compiler_params=pltpu.CompilerParams(dimension_semantics=("parallel",)),
    )(a2, r2, w, b, gamma, beta)
    return y.reshape(*lead, E)


def mlp_residual_ln(x, w1, b1, w2, b2, gamma, beta):
    """LayerNorm(relu(x@w1+b1)@w2 + b2 + x); x: (N, L, E)."""
    lead = x.shape[:-1]
    E = x.shape[-1]
    H = w1.shape[1]
    x2 = x.reshape(-1, E)
    M = x2.shape[0]
    tm = _row_tile(M)
    y = pl.pallas_call(
        _mlp_res_ln_kernel,
        grid=(pl.cdiv(M, tm),),
        in_specs=[
            pl.BlockSpec((tm, E), lambda i: (i, 0)),
            pl.BlockSpec((E, H), lambda i: (0, 0)),
            pl.BlockSpec((1, H), lambda i: (0, 0)),
            pl.BlockSpec((H, E), lambda i: (0, 0)),
            pl.BlockSpec((1, E), lambda i: (0, 0)),
            pl.BlockSpec((1, E), lambda i: (0, 0)),
            pl.BlockSpec((1, E), lambda i: (0, 0)),
        ],
        out_specs=pl.BlockSpec((tm, E), lambda i: (i, 0)),
        out_shape=jax.ShapeDtypeStruct((M, E), jnp.float32),
        compiler_params=pltpu.CompilerParams(dimension_semantics=("parallel",)),
    )(x2, w1, b1, w2, b2, gamma, beta)
    return y.reshape(*lead, E)


# ----------------------------------------------------------------------------
# Decoder forward (mirrors the PyTorch module structure; dropout == identity)
# ----------------------------------------------------------------------------
def decoder_forward(params, tokens, enc_out, src_mask, trg_mask, *, embed_size, heads):
    N, L = tokens.shape
    # Embedding gathers kept as plain-JAX glue.
    x = params["word_emb"][tokens] + params["pos_emb"][:L][None, :, :]

    for layer in params["layers"]:
        # --- DecoderBlock: masked self-attention + residual LayerNorm ---------
        sa = layer["self_attn"]
        q = linear(x, sa["w_q"])            # block-diag per-head proj, scale folded
        k = linear(x, sa["w_k"])
        v = linear(x, sa["w_v"])
        ctx = attention_core(q, k, v, trg_mask, heads=heads, embed_size=embed_size)
        query = proj_residual_ln(ctx, x, sa["fc_w"], sa["fc_b"],
                                 layer["norm_g"], layer["norm_b"])

        # --- TransformerBlock(value=enc_out, key=enc_out, query, src_mask) ----
        ca = layer["cross_attn"]
        q2 = linear(query, ca["w_q"])
        k2 = linear(enc_out, ca["w_k"])
        v2 = linear(enc_out, ca["w_v"])
        ctx2 = attention_core(q2, k2, v2, src_mask, heads=heads, embed_size=embed_size)
        xc = proj_residual_ln(ctx2, query, ca["fc_w"], ca["fc_b"],
                              layer["norm1_g"], layer["norm1_b"])
        x = mlp_residual_ln(xc, layer["ff1_w"], layer["ff1_b"],
                            layer["ff2_w"], layer["ff2_b"],
                            layer["norm2_g"], layer["norm2_b"])

    # Vocab projection: tiled (M, vocab, E) matmul (128/256-lane output tiles).
    return linear(x, params["fc_out_w"], params["fc_out_b"])


# ----------------------------------------------------------------------------
# Deterministic parameter construction (weights stored pre-transposed: (in, out))
# ----------------------------------------------------------------------------
def init_params(key, vocab, E, num_layers, heads, fexp, max_len):
    hd = E // heads
    H = fexp * E
    scale = 1.0 / math.sqrt(E)   # reference uses 1/sqrt(embed_size), not head_dim
    keys = iter(jax.random.split(key, 8 + num_layers * 16))

    def nrm(shape, s=0.02):
        return s * jax.random.normal(next(keys), shape, dtype=jnp.float32)

    def attn_params():
        eye = jnp.eye(heads, dtype=jnp.float32)
        # Per-head (hd, hd) projections expanded to block-diagonal (E, E), so the
        # head projections run as one lane-dense E-wide matmul per tensor.
        return {
            "w_q": jnp.kron(eye, nrm((hd, hd))) * scale,   # scale folded into Q
            "w_k": jnp.kron(eye, nrm((hd, hd))),
            "w_v": jnp.kron(eye, nrm((hd, hd))),
            "fc_w": nrm((E, E)),                           # (in, out)
            "fc_b": jnp.zeros((1, E), jnp.float32),
        }

    params = {
        "word_emb": nrm((vocab, E)),
        "pos_emb": nrm((max_len, E)),
        "fc_out_w": nrm((E, vocab)),                       # (in, out)
        "fc_out_b": jnp.zeros((1, vocab), jnp.float32),
        "layers": [],
    }
    for _ in range(num_layers):
        params["layers"].append({
            "self_attn": attn_params(),
            "norm_g": jnp.ones((1, E), jnp.float32),
            "norm_b": jnp.zeros((1, E), jnp.float32),
            "cross_attn": attn_params(),
            "norm1_g": jnp.ones((1, E), jnp.float32),
            "norm1_b": jnp.zeros((1, E), jnp.float32),
            "ff1_w": nrm((E, H)),                          # (in, out)
            "ff1_b": jnp.zeros((1, H), jnp.float32),
            "ff2_w": nrm((H, E)),                          # (in, out)
            "ff2_b": jnp.zeros((1, E), jnp.float32),
            "norm2_g": jnp.ones((1, E), jnp.float32),
            "norm2_b": jnp.zeros((1, E), jnp.float32),
        })
    return params


# ----------------------------------------------------------------------------
if __name__ == "__main__":
    N, L, SRC_L = 2, 8, 8
    E, HEADS, FEXP, NUM_LAYERS = 32, 4, 2, 2
    VOCAB, MAX_LEN = 128, 16   # small stand-in for trg_vocab_size=30000

    key = jax.random.PRNGKey(0)
    kp, kt, ke = jax.random.split(key, 3)

    params = init_params(kp, VOCAB, E, NUM_LAYERS, HEADS, FEXP, MAX_LEN)
    tokens = jax.random.randint(kt, (N, L), 0, VOCAB, dtype=jnp.int32)
    enc_out = jax.random.normal(ke, (N, SRC_L, E), dtype=jnp.float32)

    # trg_mask: causal (lower-triangular); src_mask: all valid. 0 == masked.
    trg_mask = jnp.broadcast_to(jnp.tril(jnp.ones((L, L), jnp.float32)), (N, L, L))
    src_mask = jnp.ones((N, L, SRC_L), jnp.float32)

    fwd = jax.jit(partial(decoder_forward, embed_size=E, heads=HEADS))
    out = jax.block_until_ready(fwd(params, tokens, enc_out, src_mask, trg_mask))

    assert out.shape == (N, L, VOCAB), out.shape
    assert bool(jnp.all(jnp.isfinite(out)))
    print("KERNEL_OK")
</pallas_src>

<mosaic_0001>
module attributes {stable_mosaic.version = 11 : i64} {
  func.func @_linear_kernel(%arg0: i32, %arg1: i32, %arg2: i32, %arg3: memref<16x32xf32, #tpu.memory_space<vmem>>, %arg4: memref<32x32xf32, #tpu.memory_space<vmem>>, %arg5: memref<1x32xf32, #tpu.memory_space<vmem>>, %arg6: memref<16x32xf32, #tpu.memory_space<vmem>>, %arg7: memref<16x32xf32, #tpu.memory_space<vmem>>) attributes {dimension_semantics = [#tpu.dimension_semantics<parallel>, #tpu.dimension_semantics<parallel>, #tpu.dimension_semantics<arbitrary>], iteration_bounds = array<i64: 1, 1, 1>, scalar_prefetch = 0 : i64, scratch_operands = 1 : i64, tpu.core_type = #tpu.core_type<tc>, window_params = [{transform_indices = @transform_0, window_bounds = array<i64: 16, 32>}, {transform_indices = @transform_1, window_bounds = array<i64: 32, 32>}, {transform_indices = @transform_2, window_bounds = array<i64: 1, 32>}, {transform_indices = @transform_3, window_bounds = array<i64: 16, 32>}]} {
    %c0_i32 = arith.constant 0 : i32
    %0 = arith.cmpi eq, %arg2, %c0_i32 : i32
    %1 = arith.extui %0 : i1 to i32
    %c0_i32_0 = arith.constant 0 : i32
    %2 = arith.cmpi ne, %1, %c0_i32_0 : i32
    scf.if %2 {
      %cst_10 = arith.constant 0.000000e+00 : f32
      %12 = vector.broadcast %cst_10 : f32 to vector<16x32xf32>
      %c0_11 = arith.constant 0 : index
      %c0_12 = arith.constant 0 : index
      %13 = vector.load %arg7[%c0_11, %c0_12] : memref<16x32xf32, #tpu.memory_space<vmem>>, vector<16x32xf32>
      tpu.vector_store %arg7[%c0_11, %c0_12], %12 {strides = array<i32>} : memref<16x32xf32, #tpu.memory_space<vmem>>, vector<16x32xf32>,
    } else {
    }
    %c0 = arith.constant 0 : index
    %c0_1 = arith.constant 0 : index
    %3 = vector.load %arg7[%c0, %c0_1] : memref<16x32xf32, #tpu.memory_space<vmem>>, vector<16x32xf32>
    %c0_2 = arith.constant 0 : index
    %c0_3 = arith.constant 0 : index
    %4 = vector.load %arg3[%c0_2, %c0_3] : memref<16x32xf32, #tpu.memory_space<vmem>>, vector<16x32xf32>
    %c0_4 = arith.constant 0 : index
    %c0_5 = arith.constant 0 : index
    %5 = vector.load %arg4[%c0_4, %c0_5] : memref<32x32xf32, #tpu.memory_space<vmem>>, vector<32x32xf32>
    %cst = arith.constant dense<0.000000e+00> : vector<16x32xf32>
    %6 = tpu.matmul %4, %5, %cst {dimension_numbers = #tpu.dot_dimension_numbers<[1], [0], [0], [1], [0, 0, 1, 1], [], []>} : vector<16x32xf32>, vector<32x32xf32>, vector<16x32xf32> -> vector<16x32xf32>
    %7 = arith.addf %3, %6 : vector<16x32xf32>
    %c0_6 = arith.constant 0 : index
    %c0_7 = arith.constant 0 : index
    %8 = vector.load %arg7[%c0_6, %c0_7] : memref<16x32xf32, #tpu.memory_space<vmem>>, vector<16x32xf32>
    tpu.vector_store %arg7[%c0_6, %c0_7], %7 {strides = array<i32>} : memref<16x32xf32, #tpu.memory_space<vmem>>, vector<16x32xf32>,
    %c0_i32_8 = arith.constant 0 : i32
    %9 = arith.cmpi eq, %arg2, %c0_i32_8 : i32
    %10 = arith.extui %9 : i1 to i32
    %c0_i32_9 = arith.constant 0 : i32
    %11 = arith.cmpi ne, %10, %c0_i32_9 : i32
    scf.if %11 {
      %c0_10 = arith.constant 0 : index
      %c0_11 = arith.constant 0 : index
      %12 = vector.load %arg7[%c0_10, %c0_11] : memref<16x32xf32, #tpu.memory_space<vmem>>, vector<16x32xf32>
      %c0_12 = arith.constant 0 : index
      %c0_13 = arith.constant 0 : index
      %13 = vector.load %arg5[%c0_12, %c0_13] : memref<1x32xf32, #tpu.memory_space<vmem>>, vector<1x32xf32>
      %14 = vector.broadcast %13 : vector<1x32xf32> to vector<16x32xf32>
      %15 = arith.addf %12, %14 : vector<16x32xf32>
      %c0_14 = arith.constant 0 : index
      %c0_15 = arith.constant 0 : index
      %16 = vector.load %arg6[%c0_14, %c0_15] : memref<16x32xf32, #tpu.memory_space<vmem>>, vector<16x32xf32>
      tpu.vector_store %arg6[%c0_14, %c0_15], %15 {strides = array<i32>} : memref<16x32xf32, #tpu.memory_space<vmem>>, vector<16x32xf32>,
    } else {
    }
    return
  }
  func.func @transform_0(%arg0: i32, %arg1: i32, %arg2: i32) -> (i32, i32) {
    %c0_i32 = arith.constant 0 : i32
    return %arg0, %arg2 : i32, i32
  }
  func.func @transform_1(%arg0: i32, %arg1: i32, %arg2: i32) -> (i32, i32) {
    %c0_i32 = arith.constant 0 : i32
    return %arg2, %arg1 : i32, i32
  }
  func.func @transform_2(%arg0: i32, %arg1: i32, %arg2: i32) -> (i32, i32) {
    %c0_i32 = arith.constant 0 : i32
    %c0_i32_0 = arith.constant 0 : i32
    return %c0_i32, %arg1 : i32, i32
  }
  func.func @transform_3(%arg0: i32, %arg1: i32, %arg2: i32) -> (i32, i32) {
    %c0_i32 = arith.constant 0 : i32
    return %arg0, %arg1 : i32, i32
  }
}

module attributes {stable_mosaic.version = 11 : i64} {
  func.func @_attn_core_kernel(%arg0: i32, %arg1: memref<1x8x32xf32, #tpu.memory_space<vmem>>, %arg2: memref<1x8x32xf32, #tpu.memory_space<vmem>>, %arg3: memref<1x8x32xf32, #tpu.memory_space<vmem>>, %arg4: memref<1x8x8xf32, #tpu.memory_space<vmem>>, %arg5: memref<1x8x32xf32, #tpu.memory_space<vmem>>) attributes {dimension_semantics = [#tpu.dimension_semantics<parallel>], iteration_bounds = array<i64: 2>, scalar_prefetch = 0 : i64, scratch_operands = 0 : i64, tpu.core_type = #tpu.core_type<tc>, window_params = [{transform_indices = @transform_0, window_bounds = array<i64: 1, 8, 32>}, {transform_indices = @transform_1, window_bounds = array<i64: 1, 8, 32>}, {transform_indices = @transform_2, window_bounds = array<i64: 1, 8, 32>}, {transform_indices = @transform_3, window_bounds = array<i64: 1, 8, 8>}, {transform_indices = @transform_4, window_bounds = array<i64: 1, 8, 32>}]} {
    %c0 = arith.constant 0 : index
    %c0_0 = arith.constant 0 : index
    %c0_1 = arith.constant 0 : index
    %0 = vector.load %arg4[%c0, %c0_0, %c0_1] : memref<1x8x8xf32, #tpu.memory_space<vmem>>, vector<1x8x8xf32>
    %1 = vector.shape_cast %0 : vector<1x8x8xf32> to vector<8x8xf32>
    %cst = arith.constant 0.000000e+00 : f32
    %2 = vector.broadcast %cst : f32 to vector<8x8xf32>
    %3 = arith.cmpf oeq, %1, %2 : vector<8x8xf32>
    %c0_2 = arith.constant 0 : index
    %c0_3 = arith.constant 0 : index
    %c0_4 = arith.constant 0 : index
    %4 = vector.load %arg1[%c0_2, %c0_3, %c0_4] : memref<1x8x32xf32, #tpu.memory_space<vmem>>, vector<1x8x8xf32>
    %5 = vector.shape_cast %4 : vector<1x8x8xf32> to vector<8x8xf32>
    %c0_5 = arith.constant 0 : index
    %c0_6 = arith.constant 0 : index
    %c0_7 = arith.constant 0 : index
    %6 = vector.load %arg2[%c0_5, %c0_6, %c0_7] : memref<1x8x32xf32, #tpu.memory_space<vmem>>, vector<1x8x8xf32>
    %7 = vector.shape_cast %6 : vector<1x8x8xf32> to vector<8x8xf32>
    %c0_8 = arith.constant 0 : index
    %c0_9 = arith.constant 0 : index
    %c0_10 = arith.constant 0 : index
    %8 = vector.load %arg3[%c0_8, %c0_9, %c0_10] : memref<1x8x32xf32, #tpu.memory_space<vmem>>, vector<1x8x8xf32>
    %9 = vector.shape_cast %8 : vector<1x8x8xf32> to vector<8x8xf32>
    %cst_11 = arith.constant dense<0.000000e+00> : vector<8x8xf32>
    %10 = tpu.matmul %5, %7, %cst_11 {dimension_numbers = #tpu.dot_dimension_numbers<[1], [1], [0], [0], [0, 0, 1, 0], [], []>} : vector<8x8xf32>, vector<8x8xf32>, vector<8x8xf32> -> vector<8x8xf32>
    %cst_12 = arith.constant -1.76776698E+27 : f32
    %11 = vector.broadcast %cst_12 : f32 to vector<8x8xf32>
    %12 = arith.select %3, %11, %10 : vector<8x8xi1>, vector<8x8xf32>
    %cst_13 = arith.constant dense<0xFF800000> : vector<8xf32>
    %13 = vector.multi_reduction <maximumf>, %12, %cst_13 [1] : vector<8x8xf32> to vector<8xf32>
    %14 = vector.shape_cast %13 : vector<8xf32> to vector<8x1xf32>
    %15 = vector.broadcast %14 : vector<8x1xf32> to vector<8x8xf32>
    %16 = arith.subf %12, %15 : vector<8x8xf32>
    %17 = math.exp %16 : vector<8x8xf32>
    %cst_14 = arith.constant dense<0.000000e+00> : vector<8xf32>
    %18 = vector.multi_reduction <add>, %17, %cst_14 [1] : vector<8x8xf32> to vector<8xf32>
    %19 = vector.shape_cast %18 : vector<8xf32> to vector<8x1xf32>
    %20 = tpu.reciprocal %19 {approx = true} : vector<8x1xf32> -> vector<8x1xf32>
    %21 = vector.broadcast %20 : vector<8x1xf32> to vector<8x8xf32>
    %22 = arith.mulf %17, %21 : vector<8x8xf32>
    %cst_15 = arith.constant dense<0.000000e+00> : vector<8x8xf32>
    %23 = tpu.matmul %22, %9, %cst_15 {dimension_numbers = #tpu.dot_dimension_numbers<[1], [0], [0], [1], [0, 0, 1, 1], [], []>} : vector<8x8xf32>, vector<8x8xf32>, vector<8x8xf32> -> vector<8x8xf32>
    %c0_16 = arith.constant 0 : index
    %c0_17 = arith.constant 0 : index
    %c0_18 = arith.constant 0 : index
    %24 = vector.load %arg5[%c0_16, %c0_17, %c0_18] : memref<1x8x32xf32, #tpu.memory_space<vmem>>, vector<1x8x8xf32>
    %25 = vector.shape_cast %24 : vector<1x8x8xf32> to vector<8x8xf32>
    %26 = vector.shape_cast %23 : vector<8x8xf32> to vector<1x8x8xf32>
    tpu.vector_store %arg5[%c0_16, %c0_17, %c0_18], %26 {strides = array<i32>} : memref<1x8x32xf32, #tpu.memory_space<vmem>>, vector<1x8x8xf32>,
    %c0_19 = arith.constant 0 : index
    %c0_20 = arith.constant 0 : index
    %c8 = arith.constant 8 : index
    %27 = vector.load %arg1[%c0_19, %c0_20, %c8] : memref<1x8x32xf32, #tpu.memory_space<vmem>>, vector<1x8x8xf32>
    %28 = vector.shape_cast %27 : vector<1x8x8xf32> to vector<8x8xf32>
    %c0_21 = arith.constant 0 : index
    %c0_22 = arith.constant 0 : index
    %c8_23 = arith.constant 8 : index
    %29 = vector.load %arg2[%c0_21, %c0_22, %c8_23] : memref<1x8x32xf32, #tpu.memory_space<vmem>>, vector<1x8x8xf32>
    %30 = vector.shape_cast %29 : vector<1x8x8xf32> to vector<8x8xf32>
    %c0_24 = arith.constant 0 : index
    %c0_25 = arith.constant 0 : index
    %c8_26 = arith.constant 8 : index
    %31 = vector.load %arg3[%c0_24, %c0_25, %c8_26] : memref<1x8x32xf32, #tpu.memory_space<vmem>>, vector<1x8x8xf32>
    %32 = vector.shape_cast %31 : vector<1x8x8xf32> to vector<8x8xf32>
    %cst_27 = arith.constant dense<0.000000e+00> : vector<8x8xf32>
    %33 = tpu.matmul %28, %30, %cst_27 {dimension_numbers = #tpu.dot_dimension_numbers<[1], [1], [0], [0], [0, 0, 1, 0], [], []>} : vector<8x8xf32>, vector<8x8xf32>, vector<8x8xf32> -> vector<8x8xf32>
    %cst_28 = arith.constant -1.76776698E+27 : f32
    %34 = vector.broadcast %cst_28 : f32 to vector<8x8xf32>
    %35 = arith.select %3, %34, %33 : vector<8x8xi1>, vector<8x8xf32>
    %cst_29 = arith.constant dense<0xFF800000> : vector<8xf32>
    %36 = vector.multi_reduction <maximumf>, %35, %cst_29 [1] : vector<8x8xf32> to vector<8xf32>
    %37 = vector.shape_cast %36 : vector<8xf32> to vector<8x1xf32>
    %38 = vector.broadcast %37 : vector<8x1xf32> to vector<8x8xf32>
    %39 = arith.subf %35, %38 : vector<8x8xf32>
    %40 = math.exp %39 : vector<8x8xf32>
    %cst_30 = arith.constant dense<0.000000e+00> : vector<8xf32>
    %41 = vector.multi_reduction <add>, %40, %cst_30 [1] : vector<8x8xf32> to vector<8xf32>
    %42 = vector.shape_cast %41 : vector<8xf32> to vector<8x1xf32>
    %43 = tpu.reciprocal %42 {approx = true} : vector<8x1xf32> -> vector<8x1xf32>
    %44 = vector.broadcast %43 : vector<8x1xf32> to vector<8x8xf32>
    %45 = arith.mulf %40, %44 : vector<8x8xf32>
    %cst_31 = arith.constant dense<0.000000e+00> : vector<8x8xf32>
    %46 = tpu.matmul %45, %32, %cst_31 {dimension_numbers = #tpu.dot_dimension_numbers<[1], [0], [0], [1], [0, 0, 1, 1], [], []>} : vector<8x8xf32>, vector<8x8xf32>, vector<8x8xf32> -> vector<8x8xf32>
    %c0_32 = arith.constant 0 : index
    %c0_33 = arith.constant 0 : index
    %c8_34 = arith.constant 8 : index
    %47 = vector.load %arg5[%c0_32, %c0_33, %c8_34] : memref<1x8x32xf32, #tpu.memory_space<vmem>>, vector<1x8x8xf32>
    %48 = vector.shape_cast %47 : vector<1x8x8xf32> to vector<8x8xf32>
    %49 = vector.shape_cast %46 : vector<8x8xf32> to vector<1x8x8xf32>
    tpu.vector_store %arg5[%c0_32, %c0_33, %c8_34], %49 {strides = array<i32>} : memref<1x8x32xf32, #tpu.memory_space<vmem>>, vector<1x8x8xf32>,
    %c0_35 = arith.constant 0 : index
    %c0_36 = arith.constant 0 : index
    %c16 = arith.constant 16 : index
    %50 = vector.load %arg1[%c0_35, %c0_36, %c16] : memref<1x8x32xf32, #tpu.memory_space<vmem>>, vector<1x8x8xf32>
    %51 = vector.shape_cast %50 : vector<1x8x8xf32> to vector<8x8xf32>
    %c0_37 = arith.constant 0 : index
    %c0_38 = arith.constant 0 : index
    %c16_39 = arith.constant 16 : index
    %52 = vector.load %arg2[%c0_37, %c0_38, %c16_39] : memref<1x8x32xf32, #tpu.memory_space<vmem>>, vector<1x8x8xf32>
    %53 = vector.shape_cast %52 : vector<1x8x8xf32> to vector<8x8xf32>
    %c0_40 = arith.constant 0 : index
    %c0_41 = arith.constant 0 : index
    %c16_42 = arith.constant 16 : index
    %54 = vector.load %arg3[%c0_40, %c0_41, %c16_42] : memref<1x8x32xf32, #tpu.memory_space<vmem>>, vector<1x8x8xf32>
    %55 = vector.shape_cast %54 : vector<1x8x8xf32> to vector<8x8xf32>
    %cst_43 = arith.constant dense<0.000000e+00> : vector<8x8xf32>
    %56 = tpu.matmul %51, %53, %cst_43 {dimension_numbers = #tpu.dot_dimension_numbers<[1], [1], [0], [0], [0, 0, 1, 0], [], []>} : vector<8x8xf32>, vector<8x8xf32>, vector<8x8xf32> -> vector<8x8xf32>
    %cst_44 = arith.constant -1.76776698E+27 : f32
    %57 = vector.broadcast %cst_44 : f32 to vector<8x8xf32>
    %58 = arith.select %3, %57, %56 : vector<8x8xi1>, vector<8x8xf32>
    %cst_45 = arith.constant dense<0xFF800000> : vector<8xf32>
    %59 = vector.multi_reduction <maximumf>, %58, %cst_45 [1] : vector<8x8xf32> to vector<8xf32>
    %60 = vector.shape_cast %59 : vector<8xf32> to vector<8x1xf32>
    %61 = vector.broadcast %60 : vector<8x1xf32> to vector<8x8xf32>
    %62 = arith.subf %58, %61 : vector<8x8xf32>
    %63 = math.exp %62 : vector<8x8xf32>
    %cst_46 = arith.constant dense<0.000000e+00> : vector<8xf32>
    %64 = vector.multi_reduction <add>, %63, %cst_46 [1] : vector<8x8xf32> to vector<8xf32>
    %65 = vector.shape_cast %64 : vector<8xf32> to vector<8x1xf32>
    %66 = tpu.reciprocal %65 {approx = true} : vector<8x1xf32> -> vector<8x1xf32>
    %67 = vector.broadcast %66 : vector<8x1xf32> to vector<8x8xf32>
    %68 = arith.mulf %63, %67 : vector<8x8xf32>
    %cst_47 = arith.constant dense<0.000000e+00> : vector<8x8xf32>
    %69 = tpu.matmul %68, %55, %cst_47 {dimension_numbers = #tpu.dot_dimension_numbers<[1], [0], [0], [1], [0, 0, 1, 1], [], []>} : vector<8x8xf32>, vector<8x8xf32>, vector<8x8xf32> -> vector<8x8xf32>
    %c0_48 = arith.constant 0 : index
    %c0_49 = arith.constant 0 : index
    %c16_50 = arith.constant 16 : index
    %70 = vector.load %arg5[%c0_48, %c0_49, %c16_50] : memref<1x8x32xf32, #tpu.memory_space<vmem>>, vector<1x8x8xf32>
    %71 = vector.shape_cast %70 : vector<1x8x8xf32> to vector<8x8xf32>
    %72 = vector.shape_cast %69 : vector<8x8xf32> to vector<1x8x8xf32>
    tpu.vector_store %arg5[%c0_48, %c0_49, %c16_50], %72 {strides = array<i32>} : memref<1x8x32xf32, #tpu.memory_space<vmem>>, vector<1x8x8xf32>,
    %c0_51 = arith.constant 0 : index
    %c0_52 = arith.constant 0 : index
    %c24 = arith.constant 24 : index
    %73 = vector.load %arg1[%c0_51, %c0_52, %c24] : memref<1x8x32xf32, #tpu.memory_space<vmem>>, vector<1x8x8xf32>
    %74 = vector.shape_cast %73 : vector<1x8x8xf32> to vector<8x8xf32>
    %c0_53 = arith.constant 0 : index
    %c0_54 = arith.constant 0 : index
    %c24_55 = arith.constant 24 : index
    %75 = vector.load %arg2[%c0_53, %c0_54, %c24_55] : memref<1x8x32xf32, #tpu.memory_space<vmem>>, vector<1x8x8xf32>
    %76 = vector.shape_cast %75 : vector<1x8x8xf32> to vector<8x8xf32>
    %c0_56 = arith.constant 0 : index
    %c0_57 = arith.constant 0 : index
    %c24_58 = arith.constant 24 : index
    %77 = vector.load %arg3[%c0_56, %c0_57, %c24_58] : memref<1x8x32xf32, #tpu.memory_space<vmem>>, vector<1x8x8xf32>
    %78 = vector.shape_cast %77 : vector<1x8x8xf32> to vector<8x8xf32>
    %cst_59 = arith.constant dense<0.000000e+00> : vector<8x8xf32>
    %79 = tpu.matmul %74, %76, %cst_59 {dimension_numbers = #tpu.dot_dimension_numbers<[1], [1], [0], [0], [0, 0, 1, 0], [], []>} : vector<8x8xf32>, vector<8x8xf32>, vector<8x8xf32> -> vector<8x8xf32>
    %cst_60 = arith.constant -1.76776698E+27 : f32
    %80 = vector.broadcast %cst_60 : f32 to vector<8x8xf32>
    %81 = arith.select %3, %80, %79 : vector<8x8xi1>, vector<8x8xf32>
    %cst_61 = arith.constant dense<0xFF800000> : vector<8xf32>
    %82 = vector.multi_reduction <maximumf>, %81, %cst_61 [1] : vector<8x8xf32> to vector<8xf32>
    %83 = vector.shape_cast %82 : vector<8xf32> to vector<8x1xf32>
    %84 = vector.broadcast %83 : vector<8x1xf32> to vector<8x8xf32>
    %85 = arith.subf %81, %84 : vector<8x8xf32>
    %86 = math.exp %85 : vector<8x8xf32>
    %cst_62 = arith.constant dense<0.000000e+00> : vector<8xf32>
    %87 = vector.multi_reduction <add>, %86, %cst_62 [1] : vector<8x8xf32> to vector<8xf32>
    %88 = vector.shape_cast %87 : vector<8xf32> to vector<8x1xf32>
    %89 = tpu.reciprocal %88 {approx = true} : vector<8x1xf32> -> vector<8x1xf32>
    %90 = vector.broadcast %89 : vector<8x1xf32> to vector<8x8xf32>
    %91 = arith.mulf %86, %90 : vector<8x8xf32>
    %cst_63 = arith.constant dense<0.000000e+00> : vector<8x8xf32>
    %92 = tpu.matmul %91, %78, %cst_63 {dimension_numbers = #tpu.dot_dimension_numbers<[1], [0], [0], [1], [0, 0, 1, 1], [], []>} : vector<8x8xf32>, vector<8x8xf32>, vector<8x8xf32> -> vector<8x8xf32>
    %c0_64 = arith.constant 0 : index
    %c0_65 = arith.constant 0 : index
    %c24_66 = arith.constant 24 : index
    %93 = vector.load %arg5[%c0_64, %c0_65, %c24_66] : memref<1x8x32xf32, #tpu.memory_space<vmem>>, vector<1x8x8xf32>
    %94 = vector.shape_cast %93 : vector<1x8x8xf32> to vector<8x8xf32>
    %95 = vector.shape_cast %92 : vector<8x8xf32> to vector<1x8x8xf32>
    tpu.vector_store %arg5[%c0_64, %c0_65, %c24_66], %95 {strides = array<i32>} : memref<1x8x32xf32, #tpu.memory_space<vmem>>, vector<1x8x8xf32>,
    return
  }
  func.func @transform_0(%arg0: i32) -> (i32, i32, i32) {
    %c0_i32 = arith.constant 0 : i32
    %c0_i32_0 = arith.constant 0 : i32
    %c0_i32_1 = arith.constant 0 : i32
    return %arg0, %c0_i32, %c0_i32_0 : i32, i32, i32
  }
  func.func @transform_1(%arg0: i32) -> (i32, i32, i32) {
    %c0_i32 = arith.constant 0 : i32
    %c0_i32_0 = arith.constant 0 : i32
    %c0_i32_1 = arith.constant 0 : i32
    return %arg0, %c0_i32, %c0_i32_0 : i32, i32, i32
  }
  func.func @transform_2(%arg0: i32) -> (i32, i32, i32) {
    %c0_i32 = arith.constant 0 : i32
    %c0_i32_0 = arith.constant 0 : i32
    %c0_i32_1 = arith.constant 0 : i32
    return %arg0, %c0_i32, %c0_i32_0 : i32, i32, i32
  }
  func.func @transform_3(%arg0: i32) -> (i32, i32, i32) {
    %c0_i32 = arith.constant 0 : i32
    %c0_i32_0 = arith.constant 0 : i32
    %c0_i32_1 = arith.constant 0 : i32
    return %arg0, %c0_i32, %c0_i32_0 : i32, i32, i32
  }
  func.func @transform_4(%arg0: i32) -> (i32, i32, i32) {
    %c0_i32 = arith.constant 0 : i32
    %c0_i32_0 = arith.constant 0 : i32
    %c0_i32_1 = arith.constant 0 : i32
    return %arg0, %c0_i32, %c0_i32_0 : i32, i32, i32
  }
}

module attributes {stable_mosaic.version = 11 : i64} {
  func.func @_proj_res_ln_kernel(%arg0: i32, %arg1: memref<16x32xf32, #tpu.memory_space<vmem>>, %arg2: memref<16x32xf32, #tpu.memory_space<vmem>>, %arg3: memref<32x32xf32, #tpu.memory_space<vmem>>, %arg4: memref<1x32xf32, #tpu.memory_space<vmem>>, %arg5: memref<1x32xf32, #tpu.memory_space<vmem>>, %arg6: memref<1x32xf32, #tpu.memory_space<vmem>>, %arg7: memref<16x32xf32, #tpu.memory_space<vmem>>) attributes {dimension_semantics = [#tpu.dimension_semantics<parallel>], iteration_bounds = array<i64: 1>, scalar_prefetch = 0 : i64, scratch_operands = 0 : i64, tpu.core_type = #tpu.core_type<tc>, window_params = [{transform_indices = @transform_0, window_bounds = array<i64: 16, 32>}, {transform_indices = @transform_1, window_bounds = array<i64: 16, 32>}, {pipeline_mode = #tpu.pipeline_mode<synchronous>, transform_indices = @transform_2, window_bounds = array<i64: 32, 32>}, {pipeline_mode = #tpu.pipeline_mode<synchronous>, transform_indices = @transform_3, window_bounds = array<i64: 1, 32>}, {pipeline_mode = #tpu.pipeline_mode<synchronous>, transform_indices = @transform_4, window_bounds = array<i64: 1, 32>}, {pipeline_mode = #tpu.pipeline_mode<synchronous>, transform_indices = @transform_5, window_bounds = array<i64: 1, 32>}, {transform_indices = @transform_6, window_bounds = array<i64: 16, 32>}]} {
    %c0 = arith.constant 0 : index
    %c0_0 = arith.constant 0 : index
    %0 = vector.load %arg1[%c0, %c0_0] : memref<16x32xf32, #tpu.memory_space<vmem>>, vector<16x32xf32>
    %c0_1 = arith.constant 0 : index
    %c0_2 = arith.constant 0 : index
    %1 = vector.load %arg3[%c0_1, %c0_2] : memref<32x32xf32, #tpu.memory_space<vmem>>, vector<32x32xf32>
    %cst = arith.constant dense<0.000000e+00> : vector<16x32xf32>
    %2 = tpu.matmul %0, %1, %cst {dimension_numbers = #tpu.dot_dimension_numbers<[1], [0], [0], [1], [0, 0, 1, 1], [], []>} : vector<16x32xf32>, vector<32x32xf32>, vector<16x32xf32> -> vector<16x32xf32>
    %c0_3 = arith.constant 0 : index
    %c0_4 = arith.constant 0 : index
    %3 = vector.load %arg4[%c0_3, %c0_4] : memref<1x32xf32, #tpu.memory_space<vmem>>, vector<1x32xf32>
    %4 = vector.broadcast %3 : vector<1x32xf32> to vector<16x32xf32>
    %5 = arith.addf %2, %4 : vector<16x32xf32>
    %c0_5 = arith.constant 0 : index
    %c0_6 = arith.constant 0 : index
    %6 = vector.load %arg2[%c0_5, %c0_6] : memref<16x32xf32, #tpu.memory_space<vmem>>, vector<16x32xf32>
    %7 = arith.addf %5, %6 : vector<16x32xf32>
    %cst_7 = arith.constant dense<0.000000e+00> : vector<16xf32>
    %8 = vector.multi_reduction <add>, %7, %cst_7 [1] : vector<16x32xf32> to vector<16xf32>
    %9 = vector.shape_cast %8 : vector<16xf32> to vector<16x1xf32>
    %cst_8 = arith.constant 3.200000e+01 : f32
    %10 = vector.broadcast %cst_8 : f32 to vector<16x1xf32>
    %11 = arith.divf %9, %10 : vector<16x1xf32>
    %12 = vector.broadcast %11 : vector<16x1xf32> to vector<16x32xf32>
    %13 = arith.subf %7, %12 : vector<16x32xf32>
    %14 = arith.mulf %13, %13 : vector<16x32xf32>
    %cst_9 = arith.constant dense<0.000000e+00> : vector<16xf32>
    %15 = vector.multi_reduction <add>, %14, %cst_9 [1] : vector<16x32xf32> to vector<16xf32>
    %16 = vector.shape_cast %15 : vector<16xf32> to vector<16x1xf32>
    %cst_10 = arith.constant 3.200000e+01 : f32
    %17 = vector.broadcast %cst_10 : f32 to vector<16x1xf32>
    %18 = arith.divf %16, %17 : vector<16x1xf32>
    %cst_11 = arith.constant 9.99999974E-6 : f32
    %19 = vector.broadcast %cst_11 : f32 to vector<16x1xf32>
    %20 = arith.addf %18, %19 : vector<16x1xf32>
    %21 = math.rsqrt %20 : vector<16x1xf32>
    %22 = vector.broadcast %21 : vector<16x1xf32> to vector<16x32xf32>
    %23 = arith.mulf %13, %22 : vector<16x32xf32>
    %c0_12 = arith.constant 0 : index
    %c0_13 = arith.constant 0 : index
    %24 = vector.load %arg5[%c0_12, %c0_13] : memref<1x32xf32, #tpu.memory_space<vmem>>, vector<1x32xf32>
    %25 = vector.broadcast %24 : vector<1x32xf32> to vector<16x32xf32>
    %26 = arith.mulf %23, %25 : vector<16x32xf32>
    %c0_14 = arith.constant 0 : index
    %c0_15 = arith.constant 0 : index
    %27 = vector.load %arg6[%c0_14, %c0_15] : memref<1x32xf32, #tpu.memory_space<vmem>>, vector<1x32xf32>
    %28 = vector.broadcast %27 : vector<1x32xf32> to vector<16x32xf32>
    %29 = arith.addf %26, %28 : vector<16x32xf32>
    %c0_16 = arith.constant 0 : index
    %c0_17 = arith.constant 0 : index
    %30 = vector.load %arg7[%c0_16, %c0_17] : memref<16x32xf32, #tpu.memory_space<vmem>>, vector<16x32xf32>
    tpu.vector_store %arg7[%c0_16, %c0_17], %29 {strides = array<i32>} : memref<16x32xf32, #tpu.memory_space<vmem>>, vector<16x32xf32>,
    return
  }
  func.func @transform_0(%arg0: i32) -> (i32, i32) {
    %c0_i32 = arith.constant 0 : i32
    %c0_i32_0 = arith.constant 0 : i32
    return %arg0, %c0_i32 : i32, i32
  }
  func.func @transform_1(%arg0: i32) -> (i32, i32) {
    %c0_i32 = arith.constant 0 : i32
    %c0_i32_0 = arith.constant 0 : i32
    return %arg0, %c0_i32 : i32, i32
  }
  func.func @transform_2(%arg0: i32) -> (i32, i32) {
    %c0_i32 = arith.constant 0 : i32
    %c0_i32_0 = arith.constant 0 : i32
    %c0_i32_1 = arith.constant 0 : i32
    return %c0_i32, %c0_i32_0 : i32, i32
  }
  func.func @transform_3(%arg0: i32) -> (i32, i32) {
    %c0_i32 = arith.constant 0 : i32
    %c0_i32_0 = arith.constant 0 : i32
    %c0_i32_1 = arith.constant 0 : i32
    return %c0_i32, %c0_i32_0 : i32, i32
  }
  func.func @transform_4(%arg0: i32) -> (i32, i32) {
    %c0_i32 = arith.constant 0 : i32
    %c0_i32_0 = arith.constant 0 : i32
    %c0_i32_1 = arith.constant 0 : i32
    return %c0_i32, %c0_i32_0 : i32, i32
  }
  func.func @transform_5(%arg0: i32) -> (i32, i32) {
    %c0_i32 = arith.constant 0 : i32
    %c0_i32_0 = arith.constant 0 : i32
    %c0_i32_1 = arith.constant 0 : i32
    return %c0_i32, %c0_i32_0 : i32, i32
  }
  func.func @transform_6(%arg0: i32) -> (i32, i32) {
    %c0_i32 = arith.constant 0 : i32
    %c0_i32_0 = arith.constant 0 : i32
    return %arg0, %c0_i32 : i32, i32
  }
}

module attributes {stable_mosaic.version = 11 : i64} {
  func.func @_mlp_res_ln_kernel(%arg0: i32, %arg1: memref<16x32xf32, #tpu.memory_space<vmem>>, %arg2: memref<32x64xf32, #tpu.memory_space<vmem>>, %arg3: memref<1x64xf32, #tpu.memory_space<vmem>>, %arg4: memref<64x32xf32, #tpu.memory_space<vmem>>, %arg5: memref<1x32xf32, #tpu.memory_space<vmem>>, %arg6: memref<1x32xf32, #tpu.memory_space<vmem>>, %arg7: memref<1x32xf32, #tpu.memory_space<vmem>>, %arg8: memref<16x32xf32, #tpu.memory_space<vmem>>) attributes {dimension_semantics = [#tpu.dimension_semantics<parallel>], iteration_bounds = array<i64: 1>, scalar_prefetch = 0 : i64, scratch_operands = 0 : i64, tpu.core_type = #tpu.core_type<tc>, window_params = [{transform_indices = @transform_0, window_bounds = array<i64: 16, 32>}, {pipeline_mode = #tpu.pipeline_mode<synchronous>, transform_indices = @transform_1, window_bounds = array<i64: 32, 64>}, {pipeline_mode = #tpu.pipeline_mode<synchronous>, transform_indices = @transform_2, window_bounds = array<i64: 1, 64>}, {pipeline_mode = #tpu.pipeline_mode<synchronous>, transform_indices = @transform_3, window_bounds = array<i64: 64, 32>}, {pipeline_mode = #tpu.pipeline_mode<synchronous>, transform_indices = @transform_4, window_bounds = array<i64: 1, 32>}, {pipeline_mode = #tpu.pipeline_mode<synchronous>, transform_indices = @transform_5, window_bounds = array<i64: 1, 32>}, {pipeline_mode = #tpu.pipeline_mode<synchronous>, transform_indices = @transform_6, window_bounds = array<i64: 1, 32>}, {transform_indices = @transform_7, window_bounds = array<i64: 16, 32>}]} {
    %c0 = arith.constant 0 : index
    %c0_0 = arith.constant 0 : index
    %0 = vector.load %arg1[%c0, %c0_0] : memref<16x32xf32, #tpu.memory_space<vmem>>, vector<16x32xf32>
    %c0_1 = arith.constant 0 : index
    %c0_2 = arith.constant 0 : index
    %1 = vector.load %arg2[%c0_1, %c0_2] : memref<32x64xf32, #tpu.memory_space<vmem>>, vector<32x64xf32>
    %cst = arith.constant dense<0.000000e+00> : vector<16x64xf32>
    %2 = tpu.matmul %0, %1, %cst {dimension_numbers = #tpu.dot_dimension_numbers<[1], [0], [0], [1], [0, 0, 1, 1], [], []>} : vector<16x32xf32>, vector<32x64xf32>, vector<16x64xf32> -> vector<16x64xf32>
    %c0_3 = arith.constant 0 : index
    %c0_4 = arith.constant 0 : index
    %3 = vector.load %arg3[%c0_3, %c0_4] : memref<1x64xf32, #tpu.memory_space<vmem>>, vector<1x64xf32>
    %4 = vector.broadcast %3 : vector<1x64xf32> to vector<16x64xf32>
    %5 = arith.addf %2, %4 : vector<16x64xf32>
    %cst_5 = arith.constant 0.000000e+00 : f32
    %6 = vector.broadcast %cst_5 : f32 to vector<16x64xf32>
    %7 = arith.maximumf %5, %6 : vector<16x64xf32>
    %c0_6 = arith.constant 0 : index
    %c0_7 = arith.constant 0 : index
    %8 = vector.load %arg4[%c0_6, %c0_7] : memref<64x32xf32, #tpu.memory_space<vmem>>, vector<64x32xf32>
    %cst_8 = arith.constant dense<0.000000e+00> : vector<16x32xf32>
    %9 = tpu.matmul %7, %8, %cst_8 {dimension_numbers = #tpu.dot_dimension_numbers<[1], [0], [0], [1], [0, 0, 1, 1], [], []>} : vector<16x64xf32>, vector<64x32xf32>, vector<16x32xf32> -> vector<16x32xf32>
    %c0_9 = arith.constant 0 : index
    %c0_10 = arith.constant 0 : index
    %10 = vector.load %arg5[%c0_9, %c0_10] : memref<1x32xf32, #tpu.memory_space<vmem>>, vector<1x32xf32>
    %11 = vector.broadcast %10 : vector<1x32xf32> to vector<16x32xf32>
    %12 = arith.addf %9, %11 : vector<16x32xf32>
    %13 = arith.addf %12, %0 : vector<16x32xf32>
    %cst_11 = arith.constant dense<0.000000e+00> : vector<16xf32>
    %14 = vector.multi_reduction <add>, %13, %cst_11 [1] : vector<16x32xf32> to vector<16xf32>
    %15 = vector.shape_cast %14 : vector<16xf32> to vector<16x1xf32>
    %cst_12 = arith.constant 3.200000e+01 : f32
    %16 = vector.broadcast %cst_12 : f32 to vector<16x1xf32>
    %17 = arith.divf %15, %16 : vector<16x1xf32>
    %18 = vector.broadcast %17 : vector<16x1xf32> to vector<16x32xf32>
    %19 = arith.subf %13, %18 : vector<16x32xf32>
    %20 = arith.mulf %19, %19 : vector<16x32xf32>
    %cst_13 = arith.constant dense<0.000000e+00> : vector<16xf32>
    %21 = vector.multi_reduction <add>, %20, %cst_13 [1] : vector<16x32xf32> to vector<16xf32>
    %22 = vector.shape_cast %21 : vector<16xf32> to vector<16x1xf32>
    %cst_14 = arith.constant 3.200000e+01 : f32
    %23 = vector.broadcast %cst_14 : f32 to vector<16x1xf32>
    %24 = arith.divf %22, %23 : vector<16x1xf32>
    %cst_15 = arith.constant 9.99999974E-6 : f32
    %25 = vector.broadcast %cst_15 : f32 to vector<16x1xf32>
    %26 = arith.addf %24, %25 : vector<16x1xf32>
    %27 = math.rsqrt %26 : vector<16x1xf32>
    %28 = vector.broadcast %27 : vector<16x1xf32> to vector<16x32xf32>
    %29 = arith.mulf %19, %28 : vector<16x32xf32>
    %c0_16 = arith.constant 0 : index
    %c0_17 = arith.constant 0 : index
    %30 = vector.load %arg6[%c0_16, %c0_17] : memref<1x32xf32, #tpu.memory_space<vmem>>, vector<1x32xf32>
    %31 = vector.broadcast %30 : vector<1x32xf32> to vector<16x32xf32>
    %32 = arith.mulf %29, %31 : vector<16x32xf32>
    %c0_18 = arith.constant 0 : index
    %c0_19 = arith.constant 0 : index
    %33 = vector.load %arg7[%c0_18, %c0_19] : memref<1x32xf32, #tpu.memory_space<vmem>>, vector<1x32xf32>
    %34 = vector.broadcast %33 : vector<1x32xf32> to vector<16x32xf32>
    %35 = arith.addf %32, %34 : vector<16x32xf32>
    %c0_20 = arith.constant 0 : index
    %c0_21 = arith.constant 0 : index
    %36 = vector.load %arg8[%c0_20, %c0_21] : memref<16x32xf32, #tpu.memory_space<vmem>>, vector<16x32xf32>
    tpu.vector_store %arg8[%c0_20, %c0_21], %35 {strides = array<i32>} : memref<16x32xf32, #tpu.memory_space<vmem>>, vector<16x32xf32>,
    return
  }
  func.func @transform_0(%arg0: i32) -> (i32, i32) {
    %c0_i32 = arith.constant 0 : i32
    %c0_i32_0 = arith.constant 0 : i32
    return %arg0, %c0_i32 : i32, i32
  }
  func.func @transform_1(%arg0: i32) -> (i32, i32) {
    %c0_i32 = arith.constant 0 : i32
    %c0_i32_0 = arith.constant 0 : i32
    %c0_i32_1 = arith.constant 0 : i32
    return %c0_i32, %c0_i32_0 : i32, i32
  }
  func.func @transform_2(%arg0: i32) -> (i32, i32) {
    %c0_i32 = arith.constant 0 : i32
    %c0_i32_0 = arith.constant 0 : i32
    %c0_i32_1 = arith.constant 0 : i32
    return %c0_i32, %c0_i32_0 : i32, i32
  }
  func.func @transform_3(%arg0: i32) -> (i32, i32) {
    %c0_i32 = arith.constant 0 : i32
    %c0_i32_0 = arith.constant 0 : i32
    %c0_i32_1 = arith.constant 0 : i32
    return %c0_i32, %c0_i32_0 : i32, i32
  }
  func.func @transform_4(%arg0: i32) -> (i32, i32) {
    %c0_i32 = arith.constant 0 : i32
    %c0_i32_0 = arith.constant 0 : i32
    %c0_i32_1 = arith.constant 0 : i32
    return %c0_i32, %c0_i32_0 : i32, i32
  }
  func.func @transform_5(%arg0: i32) -> (i32, i32) {
    %c0_i32 = arith.constant 0 : i32
    %c0_i32_0 = arith.constant 0 : i32
    %c0_i32_1 = arith.constant 0 : i32
    return %c0_i32, %c0_i32_0 : i32, i32
  }
  func.func @transform_6(%arg0: i32) -> (i32, i32) {
    %c0_i32 = arith.constant 0 : i32
    %c0_i32_0 = arith.constant 0 : i32
    %c0_i32_1 = arith.constant 0 : i32
    return %c0_i32, %c0_i32_0 : i32, i32
  }
  func.func @transform_7(%arg0: i32) -> (i32, i32) {
    %c0_i32 = arith.constant 0 : i32
    %c0_i32_0 = arith.constant 0 : i32
    return %arg0, %c0_i32 : i32, i32
  }
}

module attributes {stable_mosaic.version = 11 : i64} {
  func.func @_linear_kernel(%arg0: i32, %arg1: i32, %arg2: i32, %arg3: memref<16x32xf32, #tpu.memory_space<vmem>>, %arg4: memref<32x128xf32, #tpu.memory_space<vmem>>, %arg5: memref<1x128xf32, #tpu.memory_space<vmem>>, %arg6: memref<16x128xf32, #tpu.memory_space<vmem>>, %arg7: memref<16x128xf32, #tpu.memory_space<vmem>>) attributes {dimension_semantics = [#tpu.dimension_semantics<parallel>, #tpu.dimension_semantics<parallel>, #tpu.dimension_semantics<arbitrary>], iteration_bounds = array<i64: 1, 1, 1>, scalar_prefetch = 0 : i64, scratch_operands = 1 : i64, tpu.core_type = #tpu.core_type<tc>, window_params = [{transform_indices = @transform_0, window_bounds = array<i64: 16, 32>}, {transform_indices = @transform_1, window_bounds = array<i64: 32, 128>}, {transform_indices = @transform_2, window_bounds = array<i64: 1, 128>}, {transform_indices = @transform_3, window_bounds = array<i64: 16, 128>}]} {
    %c0_i32 = arith.constant 0 : i32
    %0 = arith.cmpi eq, %arg2, %c0_i32 : i32
    %1 = arith.extui %0 : i1 to i32
    %c0_i32_0 = arith.constant 0 : i32
    %2 = arith.cmpi ne, %1, %c0_i32_0 : i32
    scf.if %2 {
      %cst_10 = arith.constant 0.000000e+00 : f32
      %12 = vector.broadcast %cst_10 : f32 to vector<16x128xf32>
      %c0_11 = arith.constant 0 : index
      %c0_12 = arith.constant 0 : index
      %13 = vector.load %arg7[%c0_11, %c0_12] : memref<16x128xf32, #tpu.memory_space<vmem>>, vector<16x128xf32>
      tpu.vector_store %arg7[%c0_11, %c0_12], %12 {strides = array<i32>} : memref<16x128xf32, #tpu.memory_space<vmem>>, vector<16x128xf32>,
    } else {
    }
    %c0 = arith.constant 0 : index
    %c0_1 = arith.constant 0 : index
    %3 = vector.load %arg7[%c0, %c0_1] : memref<16x128xf32, #tpu.memory_space<vmem>>, vector<16x128xf32>
    %c0_2 = arith.constant 0 : index
    %c0_3 = arith.constant 0 : index
    %4 = vector.load %arg3[%c0_2, %c0_3] : memref<16x32xf32, #tpu.memory_space<vmem>>, vector<16x32xf32>
    %c0_4 = arith.constant 0 : index
    %c0_5 = arith.constant 0 : index
    %5 = vector.load %arg4[%c0_4, %c0_5] : memref<32x128xf32, #tpu.memory_space<vmem>>, vector<32x128xf32>
    %cst = arith.constant dense<0.000000e+00> : vector<16x128xf32>
    %6 = tpu.matmul %4, %5, %cst {dimension_numbers = #tpu.dot_dimension_numbers<[1], [0], [0], [1], [0, 0, 1, 1], [], []>} : vector<16x32xf32>, vector<32x128xf32>, vector<16x128xf32> -> vector<16x128xf32>
    %7 = arith.addf %3, %6 : vector<16x128xf32>
    %c0_6 = arith.constant 0 : index
    %c0_7 = arith.constant 0 : index
    %8 = vector.load %arg7[%c0_6, %c0_7] : memref<16x128xf32, #tpu.memory_space<vmem>>, vector<16x128xf32>
    tpu.vector_store %arg7[%c0_6, %c0_7], %7 {strides = array<i32>} : memref<16x128xf32, #tpu.memory_space<vmem>>, vector<16x128xf32>,
    %c0_i32_8 = arith.constant 0 : i32
    %9 = arith.cmpi eq, %arg2, %c0_i32_8 : i32
    %10 = arith.extui %9 : i1 to i32
    %c0_i32_9 = arith.constant 0 : i32
    %11 = arith.cmpi ne, %10, %c0_i32_9 : i32
    scf.if %11 {
      %c0_10 = arith.constant 0 : index
      %c0_11 = arith.constant 0 : index
      %12 = vector.load %arg7[%c0_10, %c0_11] : memref<16x128xf32, #tpu.memory_space<vmem>>, vector<16x128xf32>
      %c0_12 = arith.constant 0 : index
      %c0_13 = arith.constant 0 : index
      %13 = vector.load %arg5[%c0_12, %c0_13] : memref<1x128xf32, #tpu.memory_space<vmem>>, vector<1x128xf32>
      %14 = vector.broadcast %13 : vector<1x128xf32> to vector<16x128xf32>
      %15 = arith.addf %12, %14 : vector<16x128xf32>
      %c0_14 = arith.constant 0 : index
      %c0_15 = arith.constant 0 : index
      %16 = vector.load %arg6[%c0_14, %c0_15] : memref<16x128xf32, #tpu.memory_space<vmem>>, vector<16x128xf32>
      tpu.vector_store %arg6[%c0_14, %c0_15], %15 {strides = array<i32>} : memref<16x128xf32, #tpu.memory_space<vmem>>, vector<16x128xf32>,
    } else {
    }
    return
  }
  func.func @transform_0(%arg0: i32, %arg1: i32, %arg2: i32) -> (i32, i32) {
    %c0_i32 = arith.constant 0 : i32
    return %arg0, %arg2 : i32, i32
  }
  func.func @transform_1(%arg0: i32, %arg1: i32, %arg2: i32) -> (i32, i32) {
    %c0_i32 = arith.constant 0 : i32
    return %arg2, %arg1 : i32, i32
  }
  func.func @transform_2(%arg0: i32, %arg1: i32, %arg2: i32) -> (i32, i32) {
    %c0_i32 = arith.constant 0 : i32
    %c0_i32_0 = arith.constant 0 : i32
    return %c0_i32, %arg1 : i32, i32
  }
  func.func @transform_3(%arg0: i32, %arg1: i32, %arg2: i32) -> (i32, i32) {
    %c0_i32 = arith.constant 0 : i32
    return %arg0, %arg1 : i32, i32
  }
}

</mosaic_0001>

<llo_original>
// kernel: decoder_forward.27
$region0: #{decoder_forward.27}
  #allocation0 [shape = 'u32[]', space=smem, size = 0x4, offset = 0x4, fixed_abs, tag = 'smem constant byte address 0x4 - core index']
  #allocation1 [shape = 'u32[144,128]{1,0:T(1,128)}', space=vmem, size = 0x12000, scoped, tag = 'internal scratch']
  %s0 = inlined_call_operand.vmem [shape: f32[16,32], index: 0, kind: input, shape index: {}]
  %s1 = inlined_call_operand.vmem [shape: f32[16,32], index: 1, kind: input, shape index: {}]
  %s2 = inlined_call_operand.vmem [shape: f32[32,32], index: 2, kind: input, shape index: {}]
  %s3 = inlined_call_operand.vmem [shape: f32[1,32], index: 3, kind: input, shape index: {}]
  %s4 = inlined_call_operand.vmem [shape: f32[1,32], index: 4, kind: input, shape index: {}]
  %s5 = inlined_call_operand.vmem [shape: f32[1,32], index: 5, kind: input, shape index: {}]
  %s6 = inlined_call_operand.vmem [shape: f32[16,32], index: 6, kind: output, shape index: {}]
  %s7 = sld [smem:[#allocation0]]
  $region34: #{decoder_forward.27} parent=0
    _
  %s9 = ssub.s32 1, %s7
  %s10 = scalar_select 0, %s9, %s7
  // Predicated region
  $region2: #{decoder_forward.27} parent=0 // pred_check
    _
  $region3: #{decoder_forward.27} parent=0 // pred_check_branch
    %12 = sbr.rel (0) target = $region5
  $region4: #{decoder_forward.27} parent=0 // pred_region
    _
  $region5: #{decoder_forward.27} parent=0 // pred_fallthru
    _
  // Predicated region
  $region6: #{decoder_forward.27} parent=0 // pred_check
    _
  $region7: #{decoder_forward.27} parent=0 // pred_check_branch
    %14 = sbr.rel (0) target = $region9
  $region8: #{decoder_forward.27} parent=0 // pred_region
    _
  $region9: #{decoder_forward.27} parent=0 // pred_fallthru
    _
  // Predicated region
  $region10: #{decoder_forward.27} parent=0 // pred_check
    _
  $region11: #{decoder_forward.27} parent=0 // pred_check_branch
    %16 = sbr.rel (0) target = $region13
  $region12: #{decoder_forward.27} parent=0 // pred_region
    _
  $region13: #{decoder_forward.27} parent=0 // pred_fallthru
    _
  // Predicated region
  $region14: #{decoder_forward.27} parent=0 // pred_check
    _
  $region15: #{decoder_forward.27} parent=0 // pred_check_branch
    %18 = sbr.rel (0) target = $region17
  $region16: #{decoder_forward.27} parent=0 // pred_region
    _
  $region17: #{decoder_forward.27} parent=0 // pred_fallthru
    _
  // Predicated region
  $region18: #{decoder_forward.27} parent=0 // pred_check
    _
  $region19: #{decoder_forward.27} parent=0 // pred_check_branch
    %20 = sbr.rel (0) target = $region21
  $region20: #{decoder_forward.27} parent=0 // pred_region
    _
  $region21: #{decoder_forward.27} parent=0 // pred_fallthru
    _
  // Predicated region
  $region22: #{decoder_forward.27} parent=0 // pred_check
    _
  $region23: #{decoder_forward.27} parent=0 // pred_check_branch
    %22 = sbr.rel (0) target = $region25
  $region24: #{decoder_forward.27} parent=0 // pred_region
    _
  $region25: #{decoder_forward.27} parent=0 // pred_fallthru
    _
  %v23 = vld [vmem:[%s0] sm:$0xff]
  %v24 = vld [vmem:[%s0 + $0x8] sm:$0xff]
  %v25 = vld [vmem:[%s2] sm:$0xff]
  %v26 = vld [vmem:[%s2 + $0x8] sm:$0xff]
  %v27 = vld [vmem:[%s2 + $0x10] sm:$0xff]
  %v28 = vld [vmem:[%s2 + $0x18] sm:$0xff]
  %v29 = vld [vmem:[%s3] sm:$0x1]
  %v31 = vlaneseq
  %v32 = vshrl.u32 %v31, 7
  %v33 = vsub.s32 0, %v32
  %v34 = vrot.slane %v29, %v33
  %vm36 = vcmask 261120
  %v38 = vsel %vm36, %v23, 0
  %v41 = vsel %vm36, %v24, 0
  %43 = vmatprep.subr.mxu0 0.0
  %44 = vmatpush1.msra.mxu0 %v25
  %45 = vmatprep.subr.mxu0 0.0
  %46 = vmatpush1.msra.mxu0 %v26
  %47 = vmatprep.subr.mxu0 0.0
  %48 = vmatpush1.msra.mxu0 %v27
  %49 = vmatprep.subr.mxu0 0.0
  %50 = vmatpush1.msra.mxu0 %v28
  %51 = vmatprep.subr.mxu0 0.0
  %52 = vmatpush1.msra.mxu0 0.0
  %53 = vmatprep.subr.mxu0 0.0
  %54 = vmatpush1.msra.mxu0 0.0
  %55 = vmatprep.subr.mxu0 0.0
  %56 = vmatpush1.msra.mxu0 0.0
  %57 = vmatprep.subr.mxu0 0.0
  %58 = vmatpush1.msra.mxu0 0.0
  %59 = vmatprep.subr.mxu0 0.0
  %60 = vmatpush1.msra.mxu0 0.0
  %61 = vmatprep.subr.mxu0 0.0
  %62 = vmatpush1.msra.mxu0 0.0
  %63 = vmatprep.subr.mxu0 0.0
  %64 = vmatpush1.msra.mxu0 0.0
  %65 = vmatprep.subr.mxu0 0.0
  %66 = vmatpush1.msra.mxu0 0.0
  %67 = vmatprep.subr.mxu0 0.0
  %68 = vmatpush1.msra.mxu0 0.0
  %69 = vmatprep.subr.mxu0 0.0
  %70 = vmatpush1.msra.mxu0 0.0
  %71 = vmatprep.subr.mxu0 0.0
  %72 = vmatpush1.msra.mxu0 0.0
  %73 = vmatprep.subr.mxu0 0.0
  %74 = vmatpush1.msra.mxu0 0.0
  %75 = vmatprep.subr.mxu0 0.0
  %76 = vmatpush1.msra.mxu0 0.0
  %77 = vmatprep.subr.mxu0 0.0
  %78 = vmatpush1.msra.mxu0 0.0
  %79 = vmatprep.subr.mxu0 0.0
  %80 = vmatpush1.msra.mxu0 0.0
  %81 = vmatprep.subr.mxu0 0.0
  %82 = vmatpush1.msra.mxu0 0.0
  %83 = vmatprep.subr.mxu0 0.0
  %84 = vmatpush1.msra.mxu0 0.0
  %85 = vmatprep.subr.mxu0 0.0
  %86 = vmatpush1.msra.mxu0 0.0
  %87 = vmatprep.subr.mxu0 0.0
  %88 = vmatpush1.msra.mxu0 0.0
  %89 = vmatprep.subr.mxu0 0.0
  %90 = vmatpush1.msra.mxu0 0.0
  %91 = vmatprep.subr.mxu0 0.0
  %92 = vmatpush1.msra.mxu0 0.0
  %93 = vmatprep.subr.mxu0 0.0
  %94 = vmatpush1.msra.mxu0 0.0
  %95 = vmatprep.subr.mxu0 0.0
  %96 = vmatpush1.msra.mxu0 0.0
  %97 = vmatprep.subr.mxu0 0.0
  %98 = vmatpush1.msra.mxu0 0.0
  %99 = vmatprep.subr.mxu0 0.0
  %100 = vmatpush1.msra.mxu0 0.0
  %101 = vmatprep.subr.mxu0 0.0
  %102 = vmatpush1.msra.mxu0 0.0
  %103 = vmatprep.subr.mxu0 0.0
  %104 = vmatpush1.msra.mxu0 0.0
  %105 = vmatprep.subr.mxu0 0.0
  %106 = vmatpush1.msra.mxu0 0.0
  %107 = vmatprep.mubr.f32.mxu0 0.0
  %108 = vmatmul.mubr.f32.gmra.mrb[0].mxu0 %v38
  %v109 = vpop.f32.mrb[0].mxu0
  %v110 = vadd.f32 %v34, %v109
  %v111 = vpop.f32.mrb[0].mxu0
  %112 = vmatprep.mubr.f32.mxu0 0.0
  %113 = vmatmul.mubr.f32.gmra.mrb[0].mxu0 %v41
  %v114 = vpop.f32.mrb[0].mxu0
  %v115 = vadd.f32 %v34, %v114
  %v116 = vpop.f32.mrb[0].mxu0
  %117 = vdwg.mxu0
  %v118 = vld [vmem:[%s1] sm:$0xff]
  %v119 = vld [vmem:[%s1 + $0x8] sm:$0xff]
  %v120 = vadd.f32 %v110, %v118
  %v121 = vadd.f32 %v115, %v119
  %v122 = vsel %vm36, %v120, 0.0
  %123 = vadd.xlane.f32.xlu0 %v122
  %v124 = vpop.xlane.xlu0 %123
  %v125 = vsel %vm36, %v121, 0.0
  %126 = vadd.xlane.f32.xlu0 %v125
  %v127 = vpop.xlane.xlu0 %126
  %v128 = vrcp.pop 32.0
  %v129 = vmul.f32 %v124, %v128
  %v130 = vmul.f32 %v127, %v128
  %v131 = vsub.f32 %v120, %v129
  %v132 = vsub.f32 %v121, %v130
  %v133 = vmul.f32 %v131, %v131
  %v134 = vmul.f32 %v132, %v132
  %v135 = vsel %vm36, %v133, 0.0
  %136 = vadd.xlane.f32.xlu0 %v135
  %v137 = vpop.xlane.xlu0 %136
  %v138 = vsel %vm36, %v134, 0.0
  %139 = vadd.xlane.f32.xlu0 %v138
  %v140 = vpop.xlane.xlu0 %139
  %v141 = vmul.f32 %v137, %v128
  %v142 = vmul.f32 %v140, %v128
  %v143 = vadd.f32 %v141, 1e-05
  %v144 = vadd.f32 %v142, 1e-05
  %v145 = vrsqrt.pop %v143
  %v146 = vrsqrt.pop %v144
  %v147 = vmul.f32 %v131, %v145
  %v148 = vmul.f32 %v132, %v146
  %v149 = vld [vmem:[%s4] sm:$0x1]
  %v151 = vlaneseq
  %v152 = vshrl.u32 %v151, 7
  %v153 = vsub.s32 0, %v152
  %v154 = vrot.slane %v149, %v153
  %v156 = vmul.f32 %v147, %v154
  %v157 = vmul.f32 %v148, %v154
  %v158 = vld [vmem:[%s5] sm:$0x1]
  %v160 = vlaneseq
  %v161 = vshrl.u32 %v160, 7
  %v162 = vsub.s32 0, %v161
  %v163 = vrot.slane %v158, %v162
  %v165 = vadd.f32 %v156, %v163
  %v166 = vadd.f32 %v157, %v163
  %167 = vst.msk [vmem:[%s6] sm:$0xff] %vm36, %v165
  %168 = vst.msk [vmem:[%s6 + $0x8] sm:$0xff] %vm36, %v166
  // Predicated region
  $region26: #{decoder_forward.27} parent=0 // pred_check
    _
  $region27: #{decoder_forward.27} parent=0 // pred_check_branch
    %170 = sbr.rel (0) target = $region29
  $region28: #{decoder_forward.27} parent=0 // pred_region
    _
  $region29: #{decoder_forward.27} parent=0 // pred_fallthru
    _
  // Predicated region
  $region30: #{decoder_forward.27} parent=0 // pred_check
    _
  $region31: #{decoder_forward.27} parent=0 // pred_check_branch
    %172 = sbr.rel (0) target = $region33
  $region32: #{decoder_forward.27} parent=0 // pred_region
    _
  $region33: #{decoder_forward.27} parent=0 // pred_fallthru
    _

// kernel: decoder_forward.23
$region0: #{decoder_forward.23}
  #allocation0 [shape = 'u32[]', space=smem, size = 0x4, offset = 0x4, fixed_abs, tag = 'smem constant byte address 0x4 - core index']
  #allocation1 [shape = 'u32[144,128]{1,0:T(1,128)}', space=vmem, size = 0x12000, scoped, tag = 'internal scratch']
  #allocation2 [shape = 'f32[16,32]{1,0:T(8,128)}', space=vmem, size = 0x2000, scoped, tag = 'scratch operand']
  %s0 = inlined_call_operand.vmem [shape: f32[16,32], index: 0, kind: input, shape index: {}]
  %s1 = inlined_call_operand.vmem [shape: f32[32,32], index: 1, kind: input, shape index: {}]
  %s2 = inlined_call_operand.vmem [shape: f32[1,32], index: 2, kind: input, shape index: {}]
  %s3 = inlined_call_operand.vmem [shape: f32[16,32], index: 3, kind: output, shape index: {}]
  %s4 = sld [smem:[#allocation0]]
  $region30: #{decoder_forward.23} parent=0
    _
  %s6 = ssub.s32 1, %s4
  %s7 = scalar_select 0, %s6, %s4
  // Predicated region
  $region2: #{decoder_forward.23} parent=0 // pred_check
    _
  $region3: #{decoder_forward.23} parent=0 // pred_check_branch
    %9 = sbr.rel (0) target = $region5
  $region4: #{decoder_forward.23} parent=0 // pred_region
    _
  $region5: #{decoder_forward.23} parent=0 // pred_fallthru
    _
  // Predicated region
  $region6: #{decoder_forward.23} parent=0 // pred_check
    _
  $region7: #{decoder_forward.23} parent=0 // pred_check_branch
    %11 = sbr.rel (0) target = $region9
  $region8: #{decoder_forward.23} parent=0 // pred_region
    _
  $region9: #{decoder_forward.23} parent=0 // pred_fallthru
    _
  // Predicated region
  $region10: #{decoder_forward.23} parent=0 // pred_check
    _
  $region11: #{decoder_forward.23} parent=0 // pred_check_branch
    %13 = sbr.rel (0) target = $region13
  $region12: #{decoder_forward.23} parent=0 // pred_region
    _
  $region13: #{decoder_forward.23} parent=0 // pred_fallthru
    _
  %p14 = scmp.eq.s32.totalorder 0, 0
  // Predicated region
  $region14: #{decoder_forward.23} parent=0 // pred_check
    %p15 = pneg %p14
  $region15: #{decoder_forward.23} parent=0 // pred_check_branch
    %17 = sbr.rel (%p15) target = $region17
  $region16: #{decoder_forward.23} parent=0 // pred_region
    %vm18 = vcmask 261120
    %19 = vst.msk [vmem:[#allocation2] sm:$0xff] %vm18, 0.0
    %20 = vst.msk [vmem:[#allocation2 + $0x8] sm:$0xff] %vm18, 0.0
  $region17: #{decoder_forward.23} parent=0 // pred_fallthru
    _
  %v21 = vld [vmem:[#allocation2] sm:$0xff]
  %v22 = vld [vmem:[#allocation2 + $0x8] sm:$0xff]
  %v23 = vld [vmem:[%s0] sm:$0xff]
  %v24 = vld [vmem:[%s0 + $0x8] sm:$0xff]
  %v25 = vld [vmem:[%s1] sm:$0xff]
  %v26 = vld [vmem:[%s1 + $0x8] sm:$0xff]
  %v27 = vld [vmem:[%s1 + $0x10] sm:$0xff]
  %v28 = vld [vmem:[%s1 + $0x18] sm:$0xff]
  %vm29 = vcmask 261120
  %v31 = vsel %vm29, %v23, 0
  %v34 = vsel %vm29, %v24, 0
  %36 = vmatprep.subr.mxu0 0.0
  %37 = vmatpush1.msra.mxu0 %v25
  %38 = vmatprep.subr.mxu0 0.0
  %39 = vmatpush1.msra.mxu0 %v26
  %40 = vmatprep.subr.mxu0 0.0
  %41 = vmatpush1.msra.mxu0 %v27
  %42 = vmatprep.subr.mxu0 0.0
  %43 = vmatpush1.msra.mxu0 %v28
  %44 = vmatprep.subr.mxu0 0.0
  %45 = vmatpush1.msra.mxu0 0.0
  %46 = vmatprep.subr.mxu0 0.0
  %47 = vmatpush1.msra.mxu0 0.0
  %48 = vmatprep.subr.mxu0 0.0
  %49 = vmatpush1.msra.mxu0 0.0
  %50 = vmatprep.subr.mxu0 0.0
  %51 = vmatpush1.msra.mxu0 0.0
  %52 = vmatprep.subr.mxu0 0.0
  %53 = vmatpush1.msra.mxu0 0.0
  %54 = vmatprep.subr.mxu0 0.0
  %55 = vmatpush1.msra.mxu0 0.0
  %56 = vmatprep.subr.mxu0 0.0
  %57 = vmatpush1.msra.mxu0 0.0
  %58 = vmatprep.subr.mxu0 0.0
  %59 = vmatpush1.msra.mxu0 0.0
  %60 = vmatprep.subr.mxu0 0.0
  %61 = vmatpush1.msra.mxu0 0.0
  %62 = vmatprep.subr.mxu0 0.0
  %63 = vmatpush1.msra.mxu0 0.0
  %64 = vmatprep.subr.mxu0 0.0
  %65 = vmatpush1.msra.mxu0 0.0
  %66 = vmatprep.subr.mxu0 0.0
  %67 = vmatpush1.msra.mxu0 0.0
  %68 = vmatprep.subr.mxu0 0.0
  %69 = vmatpush1.msra.mxu0 0.0
  %70 = vmatprep.subr.mxu0 0.0
  %71 = vmatpush1.msra.mxu0 0.0
  %72 = vmatprep.subr.mxu0 0.0
  %73 = vmatpush1.msra.mxu0 0.0
  %74 = vmatprep.subr.mxu0 0.0
  %75 = vmatpush1.msra.mxu0 0.0
  %76 = vmatprep.subr.mxu0 0.0
  %77 = vmatpush1.msra.mxu0 0.0
  %78 = vmatprep.subr.mxu0 0.0
  %79 = vmatpush1.msra.mxu0 0.0
  %80 = vmatprep.subr.mxu0 0.0
  %81 = vmatpush1.msra.mxu0 0.0
  %82 = vmatprep.subr.mxu0 0.0
  %83 = vmatpush1.msra.mxu0 0.0
  %84 = vmatprep.subr.mxu0 0.0
  %85 = vmatpush1.msra.mxu0 0.0
  %86 = vmatprep.subr.mxu0 0.0
  %87 = vmatpush1.msra.mxu0 0.0
  %88 = vmatprep.subr.mxu0 0.0
  %89 = vmatpush1.msra.mxu0 0.0
  %90 = vmatprep.subr.mxu0 0.0
  %91 = vmatpush1.msra.mxu0 0.0
  %92 = vmatprep.subr.mxu0 0.0
  %93 = vmatpush1.msra.mxu0 0.0
  %94 = vmatprep.subr.mxu0 0.0
  %95 = vmatpush1.msra.mxu0 0.0
  %96 = vmatprep.subr.mxu0 0.0
  %97 = vmatpush1.msra.mxu0 0.0
  %98 = vmatprep.subr.mxu0 0.0
  %99 = vmatpush1.msra.mxu0 0.0
  %100 = vmatprep.mubr.f32.mxu0 0.0
  %101 = vmatmul.mubr.f32.gmra.mrb[0].mxu0 %v31
  %v102 = vpop.f32.mrb[0].mxu0
  %v103 = vadd.f32 0.0, %v102
  %v104 = vpop.f32.mrb[0].mxu0
  %105 = vmatprep.mubr.f32.mxu0 0.0
  %106 = vmatmul.mubr.f32.gmra.mrb[0].mxu0 %v34
  %v107 = vpop.f32.mrb[0].mxu0
  %v108 = vadd.f32 0.0, %v107
  %v109 = vpop.f32.mrb[0].mxu0
  %110 = vdwg.mxu0
  %v111 = vadd.f32 %v21, %v103
  %v112 = vadd.f32 %v22, %v108
  %113 = vst.msk [vmem:[#allocation2] sm:$0xff] %vm29, %v111
  %114 = vst.msk [vmem:[#allocation2 + $0x8] sm:$0xff] %vm29, %v112
  // Predicated region
  $region18: #{decoder_forward.23} parent=0 // pred_check
    %p115 = pneg %p14
  $region19: #{decoder_forward.23} parent=0 // pred_check_branch
    %117 = sbr.rel (%p115) target = $region21
  $region20: #{decoder_forward.23} parent=0 // pred_region
    %v118 = vld [vmem:[#allocation2] sm:$0xff]
    %v119 = vld [vmem:[#allocation2 + $0x8] sm:$0xff]
    %v120 = vld [vmem:[%s2] sm:$0x1]
    %v122 = vlaneseq
    %v123 = vshrl.u32 %v122, 7
    %v124 = vsub.s32 0, %v123
    %v125 = vrot.slane %v120, %v124
    %v127 = vadd.f32 %v118, %v125
    %v128 = vadd.f32 %v119, %v125
    %129 = vst.msk [vmem:[%s3] sm:$0xff] %vm29, %v127
    %130 = vst.msk [vmem:[%s3 + $0x8] sm:$0xff] %vm29, %v128
  $region21: #{decoder_forward.23} parent=0 // pred_fallthru
    _
  // Predicated region
  $region22: #{decoder_forward.23} parent=0 // pred_check
    _
  $region23: #{decoder_forward.23} parent=0 // pred_check_branch
    %132 = sbr.rel (0) target = $region25
  $region24: #{decoder_forward.23} parent=0 // pred_region
    _
  $region25: #{decoder_forward.23} parent=0 // pred_fallthru
    _
  // Predicated region
  $region26: #{decoder_forward.23} parent=0 // pred_check
    _
  $region27: #{decoder_forward.23} parent=0 // pred_check_branch
    %134 = sbr.rel (0) target = $region29
  $region28: #{decoder_forward.23} parent=0 // pred_region
    _
  $region29: #{decoder_forward.23} parent=0 // pred_fallthru
    _

// kernel: decoder_forward.26
$region0: #{decoder_forward.26}
  #allocation0 [shape = 'u32[]', space=smem, size = 0x4, offset = 0x4, fixed_abs, tag = 'smem constant byte address 0x4 - core index']
  #allocation1 [shape = 'u32[144,128]{1,0:T(1,128)}', space=vmem, size = 0x12000, scoped, tag = 'internal scratch']
  %s0 = inlined_call_operand.vmem [shape: f32[2,8,32], index: 0, kind: input, shape index: {}]
  %s1 = inlined_call_operand.vmem [shape: f32[2,8,32], index: 1, kind: input, shape index: {}]
  %s2 = inlined_call_operand.vmem [shape: f32[2,8,32], index: 2, kind: input, shape index: {}]
  %s3 = inlined_call_operand.vmem [shape: f32[2,8,8], index: 3, kind: input, shape index: {}]
  %s4 = inlined_call_operand.vmem [shape: f32[2,8,32], index: 4, kind: output, shape index: {}]
  %s5 = sld [smem:[#allocation0]]
  $region49: #{decoder_forward.26} parent=0
    _
  %s7 = ssub.s32 1, %s5
  %s8 = scalar_select 0, %s7, %s5
  loop: start=0, step=1, limit=4
  $region2: #{decoder_forward.26} parent=0 // loop_pre_header
    _
  $region3: #{decoder_forward.26} parent=0 // loop_header
    %s10 = sphi 0, %s14
    %p11 = scmp.ge.s32.totalorder %s10, 4
    %s20 = sphi 0, %s22
    %s23 = sphi 0, %s20
    %s24 = sphi 0, %s23
    %s40 = sphi 0, %s24
    %s46 = sphi 0, %s48
    %s49 = sphi 0, %s46
    %s50 = sphi 0, %s49
    %s66 = sphi 0, %s50
    %s72 = sphi 0, %s74
    %s75 = sphi 0, %s72
    %s76 = sphi 0, %s75
    %s92 = sphi 0, %s76
    %s98 = sphi 0, %s100
    %s101 = sphi 0, %s98
    %s102 = sphi 0, %s101
    %s118 = sphi 0, %s102
    %s124 = sphi 0, %s126
    %s127 = sphi 0, %s124
    %s128 = sphi 0, %s127
    %s144 = sphi 0, %s128
  $region4: #{decoder_forward.26} parent=0 // loop_header_branch
    %13 = sbr.rel (%p11) target = $region8
  $region5: #{decoder_forward.26} parent=0 // loop_body
    %s15 = ssub.s32 %s10, 1
    %s16 = ssub.s32 %s10, 2
    %s17 = sadd.s32 %s10, 1
    %s18 = ssub.s32 %s10, %s17
    %p19 = scmp.eq.s32.totalorder %s18, 0
    %s21 = sadd.s32 %s20, 1
    %s22 = scalar_select %p19, %s20, %s21
    %p25 = pneg %p19
    %p26 = scmp.eq.s32.totalorder %s10, 1
    %p27 = por %p25, %p26
    %p28 = scmp.ne.s32.totalorder %s20, %s23
    %p29 = scmp.eq.s32.totalorder %s10, 0
    %p30 = por %p28, %p29
    %p31 = scmp.ne.s32.totalorder %s20, %s23
    %p32 = scmp.eq.s32.totalorder %s15, 1
    %p33 = por %p31, %p32
    %p34 = scmp.ne.s32.totalorder %s23, %s24
    %p35 = scmp.eq.s32.totalorder %s15, 0
    %p36 = por %p34, %p35
    %p37 = scmp.ne.s32.totalorder %s23, %s24
    %p38 = scmp.eq.s32.totalorder %s16, 1
    %p39 = por %p37, %p38
    %p41 = scmp.ne.s32.totalorder %s24, %s40
    %p42 = scmp.eq.s32.totalorder %s16, 0
    %p43 = por %p41, %p42
    %s44 = ssub.s32 %s10, %s17
    %p45 = scmp.eq.s32.totalorder %s44, 0
    %s47 = sadd.s32 %s46, 1
    %s48 = scalar_select %p45, %s46, %s47
    %p51 = pneg %p45
    %p52 = scmp.eq.s32.totalorder %s10, 1
    %p53 = por %p51, %p52
    %p54 = scmp.ne.s32.totalorder %s46, %s49
    %p55 = scmp.eq.s32.totalorder %s10, 0
    %p56 = por %p54, %p55
    %p57 = scmp.ne.s32.totalorder %s46, %s49
    %p58 = scmp.eq.s32.totalorder %s15, 1
    %p59 = por %p57, %p58
    %p60 = scmp.ne.s32.totalorder %s49, %s50
    %p61 = scmp.eq.s32.totalorder %s15, 0
    %p62 = por %p60, %p61
    %p63 = scmp.ne.s32.totalorder %s49, %s50
    %p64 = scmp.eq.s32.totalorder %s16, 1
    %p65 = por %p63, %p64
    %p67 = scmp.ne.s32.totalorder %s50, %s66
    %p68 = scmp.eq.s32.totalorder %s16, 0
    %p69 = por %p67, %p68
    %s70 = ssub.s32 %s10, %s17
    %p71 = scmp.eq.s32.totalorder %s70, 0
    %s73 = sadd.s32 %s72, 1
    %s74 = scalar_select %p71, %s72, %s73
    %p77 = pneg %p71
    %p78 = scmp.eq.s32.totalorder %s10, 1
    %p79 = por %p77, %p78
    %p80 = scmp.ne.s32.totalorder %s72, %s75
    %p81 = scmp.eq.s32.totalorder %s10, 0
    %p82 = por %p80, %p81
    %p83 = scmp.ne.s32.totalorder %s72, %s75
    %p84 = scmp.eq.s32.totalorder %s15, 1
    %p85 = por %p83, %p84
    %p86 = scmp.ne.s32.totalorder %s75, %s76
    %p87 = scmp.eq.s32.totalorder %s15, 0
    %p88 = por %p86, %p87
    %p89 = scmp.ne.s32.totalorder %s75, %s76
    %p90 = scmp.eq.s32.totalorder %s16, 1
    %p91 = por %p89, %p90
    %p93 = scmp.ne.s32.totalorder %s76, %s92
    %p94 = scmp.eq.s32.totalorder %s16, 0
    %p95 = por %p93, %p94
    %s96 = ssub.s32 %s10, %s17
    %p97 = scmp.eq.s32.totalorder %s96, 0
    %s99 = sadd.s32 %s98, 1
    %s100 = scalar_select %p97, %s98, %s99
    %p103 = pneg %p97
    %p104 = scmp.eq.s32.totalorder %s10, 1
    %p105 = por %p103, %p104
    %p106 = scmp.ne.s32.totalorder %s98, %s101
    %p107 = scmp.eq.s32.totalorder %s10, 0
    %p108 = por %p106, %p107
    %p109 = scmp.ne.s32.totalorder %s98, %s101
    %p110 = scmp.eq.s32.totalorder %s15, 1
    %p111 = por %p109, %p110
    %p112 = scmp.ne.s32.totalorder %s101, %s102
    %p113 = scmp.eq.s32.totalorder %s15, 0
    %p114 = por %p112, %p113
    %p115 = scmp.ne.s32.totalorder %s101, %s102
    %p116 = scmp.eq.s32.totalorder %s16, 1
    %p117 = por %p115, %p116
    %p119 = scmp.ne.s32.totalorder %s102, %s118
    %p120 = scmp.eq.s32.totalorder %s16, 0
    %p121 = por %p119, %p120
    %s122 = ssub.s32 %s10, %s17
    %p123 = scmp.eq.s32.totalorder %s122, 0
    %s125 = sadd.s32 %s124, 1
    %s126 = scalar_select %p123, %s124, %s125
    %p129 = pneg %p123
    %p130 = scmp.eq.s32.totalorder %s10, 1
    %p131 = por %p129, %p130
    %p132 = scmp.ne.s32.totalorder %s124, %s127
    %p133 = scmp.eq.s32.totalorder %s10, 0
    %p134 = por %p132, %p133
    %p135 = scmp.ne.s32.totalorder %s124, %s127
    %p136 = scmp.eq.s32.totalorder %s15, 1
    %p137 = por %p135, %p136
    %p138 = scmp.ne.s32.totalorder %s127, %s128
    %p139 = scmp.eq.s32.totalorder %s15, 0
    %p140 = por %p138, %p139
    %p141 = scmp.ne.s32.totalorder %s127, %s128
    %p142 = scmp.eq.s32.totalorder %s16, 1
    %p143 = por %p141, %p142
    %p145 = scmp.ne.s32.totalorder %s128, %s144
    %p146 = scmp.eq.s32.totalorder %s16, 0
    %p147 = por %p145, %p146
    %p148 = scmp.le.s32.totalorder 1, %s10
    %p149 = scmp.lt.s32.totalorder %s10, 3
    %p150 = pnand %p148, %p149
    %p151 = pneg %p150
    // Predicated region
    $region9: #{decoder_forward.26} parent=5 // pred_check
      _
    $region10: #{decoder_forward.26} parent=5 // pred_check_branch
      %153 = sbr.rel (%p150) target = $region12
    $region11: #{decoder_forward.26} parent=5 // pred_region
      %s154 = ssub.s32 %s10, 1
    $region12: #{decoder_forward.26} parent=5 // pred_fallthru
      _
    %p155 = scmp.lt.s32.totalorder %s10, 2
    // Predicated region
    $region13: #{decoder_forward.26} parent=5 // pred_check
      %p156 = pneg %p155
    $region14: #{decoder_forward.26} parent=5 // pred_check_branch
      %158 = sbr.rel (%p156) target = $region16
    $region15: #{decoder_forward.26} parent=5 // pred_region
      // Predicated region
      $region17: #{decoder_forward.26} parent=15 // pred_check
        %p159 = pneg %p30
      $region18: #{decoder_forward.26} parent=15 // pred_check_branch
        %161 = sbr.rel (%p159) target = $region20
      $region19: #{decoder_forward.26} parent=15 // pred_region
        %p162 = scmp.lt.s32.totalorder %s10, 1
        %s163 = scalar_select %p162, %s10, 1
        %s164 = smul.addr %s163, 8
        %s165 = scalar_lea.vmem %s0, %s164
      $region20: #{decoder_forward.26} parent=15 // pred_fallthru
        _
      // Predicated region
      $region21: #{decoder_forward.26} parent=15 // pred_check
        %p166 = pneg %p56
      $region22: #{decoder_forward.26} parent=15 // pred_check_branch
        %168 = sbr.rel (%p166) target = $region24
      $region23: #{decoder_forward.26} parent=15 // pred_region
        %p169 = scmp.lt.s32.totalorder %s10, 1
        %s170 = scalar_select %p169, %s10, 1
        %s171 = smul.addr %s170, 8
        %s172 = scalar_lea.vmem %s1, %s171
      $region24: #{decoder_forward.26} parent=15 // pred_fallthru
        _
      // Predicated region
      $region25: #{decoder_forward.26} parent=15 // pred_check
        %p173 = pneg %p82
      $region26: #{decoder_forward.26} parent=15 // pred_check_branch
        %175 = sbr.rel (%p173) target = $region28
      $region27: #{decoder_forward.26} parent=15 // pred_region
        %p176 = scmp.lt.s32.totalorder %s10, 1
        %s177 = scalar_select %p176, %s10, 1
        %s178 = smul.addr %s177, 8
        %s179 = scalar_lea.vmem %s2, %s178
      $region28: #{decoder_forward.26} parent=15 // pred_fallthru
        _
      // Predicated region
      $region29: #{decoder_forward.26} parent=15 // pred_check
        %p180 = pneg %p108
      $region30: #{decoder_forward.26} parent=15 // pred_check_branch
        %182 = sbr.rel (%p180) target = $region32
      $region31: #{decoder_forward.26} parent=15 // pred_region
        %p183 = scmp.lt.s32.totalorder %s10, 1
        %s184 = scalar_select %p183, %s10, 1
        %s185 = smul.addr %s184, 8
        %s186 = scalar_lea.vmem %s3, %s185
      $region32: #{decoder_forward.26} parent=15 // pred_fallthru
        _
    $region16: #{decoder_forward.26} parent=5 // pred_fallthru
      _
    %p187 = scmp.le.s32.totalorder 1, %s10
    %p188 = scmp.lt.s32.totalorder %s10, 3
    %p189 = pnand %p187, %p188
    %p190 = pneg %p189
    // Predicated region
    $region33: #{decoder_forward.26} parent=5 // pred_check
      _
    $region34: #{decoder_forward.26} parent=5 // pred_check_branch
      %192 = sbr.rel (%p189) target = $region36
    $region35: #{decoder_forward.26} parent=5 // pred_region
      %s193 = ssub.s32 %s10, 1
      %p194 = scmp.lt.s32.totalorder %s15, 1
      %s195 = scalar_select %p194, %s15, 1
      %s196 = smul.addr %s195, 8
      %s197 = scalar_lea.vmem %s0, %s196
      %p198 = pneg %p36
      %p199 = pneg %p33
      %p200 = scmp.lt.s32.totalorder %s15, 1
      %s201 = scalar_select %p200, %s15, 1
      %s202 = smul.addr %s201, 8
      %s203 = scalar_lea.vmem %s1, %s202
      %p204 = pneg %p62
      %p205 = pneg %p59
      %p206 = scmp.lt.s32.totalorder %s15, 1
      %s207 = scalar_select %p206, %s15, 1
      %s208 = smul.addr %s207, 8
      %s209 = scalar_lea.vmem %s2, %s208
      %p210 = pneg %p88
      %p211 = pneg %p85
      %p212 = scmp.lt.s32.totalorder %s15, 1
      %s213 = scalar_select %p212, %s15, 1
      %s214 = smul.addr %s213, 8
      %s215 = scalar_lea.vmem %s3, %s214
      %p216 = pneg %p114
      %p217 = pneg %p111
      %p218 = pneg %p140
      %p219 = pneg %p137
      %p220 = scmp.lt.s32.totalorder %s15, 1
      %s221 = scalar_select %p220, %s15, 1
      %s222 = smul.addr %s221, 8
      %s223 = scalar_lea.vmem %s4, %s222
      %p224 = scmp.lt.s32.totalorder %s15, 1
      %s225 = scalar_select %p224, %s15, 1
      %s226 = smul.addr %s225, 8
      %s227 = scalar_lea.vmem %s0, %s226
      %p228 = scmp.lt.s32.totalorder %s15, 1
      %s229 = scalar_select %p228, %s15, 1
      %s230 = smul.addr %s229, 8
      %s231 = scalar_lea.vmem %s1, %s230
      %p232 = scmp.lt.s32.totalorder %s15, 1
      %s233 = scalar_select %p232, %s15, 1
      %s234 = smul.addr %s233, 8
      %s235 = scalar_lea.vmem %s2, %s234
      %p236 = scmp.lt.s32.totalorder %s15, 1
      %s237 = scalar_select %p236, %s15, 1
      %s238 = smul.addr %s237, 8
      %s239 = scalar_lea.vmem %s3, %s238
      %p240 = scmp.lt.s32.totalorder %s15, 1
      %s241 = scalar_select %p240, %s15, 1
      %s242 = smul.addr %s241, 8
      %s243 = scalar_lea.vmem %s4, %s242
      %v244 = vld [vmem:[%s239] sm:$0xff]
      %vm245 = vcmp.eq.f32.partialorder %v244, 0.0
      %v246 = vld [vmem:[%s227] sm:$0xff]
      %v247 = vld [vmem:[%s231] sm:$0xff]
      %v248 = vld [vmem:[%s235] sm:$0xff]
      %vm249 = vcmask 64512
      %v251 = vsel %vm249, %v246, 0
      %v254 = vsel %vm249, %v247, 0
      %256 = vmatprep.subr.mxu0 0.0
      %257 = vmatpush1.xpose.msra.mxu0 %v254
      %258 = vmatprep.subr.mxu0 0.0
      %259 = vmatpush1.xpose.msra.mxu0 0.0
      %260 = vmatprep.subr.mxu0 0.0
      %261 = vmatpush1.xpose.msra.mxu0 0.0
      %262 = vmatprep.subr.mxu0 0.0
      %263 = vmatpush1.xpose.msra.mxu0 0.0
      %264 = vmatprep.subr.mxu0 0.0
      %265 = vmatpush1.xpose.msra.mxu0 0.0
      %266 = vmatprep.subr.mxu0 0.0
      %267 = vmatpush1.xpose.msra.mxu0 0.0
      %268 = vmatprep.subr.mxu0 0.0
      %269 = vmatpush1.xpose.msra.mxu0 0.0
      %270 = vmatprep.subr.mxu0 0.0
      %271 = vmatpush1.xpose.msra.mxu0 0.0
      %272 = vmatprep.subr.mxu0 0.0
      %273 = vmatpush1.xpose.msra.mxu0 0.0
      %274 = vmatprep.subr.mxu0 0.0
      %275 = vmatpush1.xpose.msra.mxu0 0.0
      %276 = vmatprep.subr.mxu0 0.0
      %277 = vmatpush1.xpose.msra.mxu0 0.0
      %278 = vmatprep.subr.mxu0 0.0
      %279 = vmatpush1.xpose.msra.mxu0 0.0
      %280 = vmatprep.subr.mxu0 0.0
      %281 = vmatpush1.xpose.msra.mxu0 0.0
      %282 = vmatprep.subr.mxu0 0.0
      %283 = vmatpush1.xpose.msra.mxu0 0.0
      %284 = vmatprep.subr.mxu0 0.0
      %285 = vmatpush1.xpose.msra.mxu0 0.0
      %286 = vmatprep.subr.mxu0 0.0
      %287 = vmatpush1.xpose.msra.mxu0 0.0
      %288 = vmatprep.subr.mxu0 0.0
      %289 = vmatpush1.xpose.msra.mxu0 0.0
      %290 = vmatprep.subr.mxu0 0.0
      %291 = vmatpush1.xpose.msra.mxu0 0.0
      %292 = vmatprep.subr.mxu0 0.0
      %293 = vmatpush1.xpose.msra.mxu0 0.0
      %294 = vmatprep.subr.mxu0 0.0
      %295 = vmatpush1.xpose.msra.mxu0 0.0
      %296 = vmatprep.subr.mxu0 0.0
      %297 = vmatpush1.xpose.msra.mxu0 0.0
      %298 = vmatprep.subr.mxu0 0.0
      %299 = vmatpush1.xpose.msra.mxu0 0.0
      %300 = vmatprep.subr.mxu0 0.0
      %301 = vmatpush1.xpose.msra.mxu0 0.0
      %302 = vmatprep.subr.mxu0 0.0
      %303 = vmatpush1.xpose.msra.mxu0 0.0
      %304 = vmatprep.subr.mxu0 0.0
      %305 = vmatpush1.xpose.msra.mxu0 0.0
      %306 = vmatprep.subr.mxu0 0.0
      %307 = vmatpush1.xpose.msra.mxu0 0.0
      %308 = vmatprep.subr.mxu0 0.0
      %309 = vmatpush1.xpose.msra.mxu0 0.0
      %310 = vmatprep.subr.mxu0 0.0
      %311 = vmatpush1.xpose.msra.mxu0 0.0
      %312 = vmatprep.subr.mxu0 0.0
      %313 = vmatpush1.xpose.msra.mxu0 0.0
      %314 = vmatprep.subr.mxu0 0.0
      %315 = vmatpush1.xpose.msra.mxu0 0.0
      %316 = vmatprep.subr.mxu0 0.0
      %317 = vmatpush1.xpose.msra.mxu0 0.0
      %318 = vmatprep.subr.mxu0 0.0
      %319 = vmatpush1.xpose.msra.mxu0 0.0
      %320 = vmatprep.mubr.f32.mxu0 0.0
      %321 = vmatmul.mubr.f32.gmra.mrb[0].mxu0 %v251
      %v322 = vpop.f32.mrb[0].mxu0
      %v323 = vadd.f32 0.0, %v322
      %v324 = vpop.f32.mrb[0].mxu0
      %325 = vdwg.mxu0
      %v326 = vsel %vm245, -1.767767e+27, %v323
      %v327 = vsel %vm249, %v326, -inf
      %328 = vmax.xlane.f32.xlu0 %v327
      %v329 = vpop.xlane.xlu0 %328
      %v330 = vsub.f32 %v326, %v329
      %v331 = vmul.f32 %v330, 1.442695
      %v332 = vpow.pop %v331
      %v333 = vsel %vm249, %v332, 0.0
      %334 = vadd.xlane.f32.xlu0 %v333
      %v335 = vpop.xlane.xlu0 %334
      %v336 = vrcp.pop %v335
      %v337 = vmul.f32 %v332, %v336
      %v339 = vsel %vm249, %v337, 0
      %341 = vmatprep.subr.mxu0 0.0
      %342 = vmatpush1.msra.mxu0 %v248
      %343 = vmatprep.subr.mxu0 0.0
      %344 = vmatpush1.msra.mxu0 0.0
      %345 = vmatprep.subr.mxu0 0.0
      %346 = vmatpush1.msra.mxu0 0.0
      %347 = vmatprep.subr.mxu0 0.0
      %348 = vmatpush1.msra.mxu0 0.0
      %349 = vmatprep.subr.mxu0 0.0
      %350 = vmatpush1.msra.mxu0 0.0
      %351 = vmatprep.subr.mxu0 0.0
      %352 = vmatpush1.msra.mxu0 0.0
      %353 = vmatprep.subr.mxu0 0.0
      %354 = vmatpush1.msra.mxu0 0.0
      %355 = vmatprep.subr.mxu0 0.0
      %356 = vmatpush1.msra.mxu0 0.0
      %357 = vmatprep.subr.mxu0 0.0
      %358 = vmatpush1.msra.mxu0 0.0
      %359 = vmatprep.subr.mxu0 0.0
      %360 = vmatpush1.msra.mxu0 0.0
      %361 = vmatprep.subr.mxu0 0.0
      %362 = vmatpush1.msra.mxu0 0.0
      %363 = vmatprep.subr.mxu0 0.0
      %364 = vmatpush1.msra.mxu0 0.0
      %365 = vmatprep.subr.mxu0 0.0
      %366 = vmatpush1.msra.mxu0 0.0
      %367 = vmatprep.subr.mxu0 0.0
      %368 = vmatpush1.msra.mxu0 0.0
      %369 = vmatprep.subr.mxu0 0.0
      %370 = vmatpush1.msra.mxu0 0.0
      %371 = vmatprep.subr.mxu0 0.0
      %372 = vmatpush1.msra.mxu0 0.0
      %373 = vmatprep.subr.mxu0 0.0
      %374 = vmatpush1.msra.mxu0 0.0
      %375 = vmatprep.subr.mxu0 0.0
      %376 = vmatpush1.msra.mxu0 0.0
      %377 = vmatprep.subr.mxu0 0.0
      %378 = vmatpush1.msra.mxu0 0.0
      %379 = vmatprep.subr.mxu0 0.0
      %380 = vmatpush1.msra.mxu0 0.0
      %381 = vmatprep.subr.mxu0 0.0
      %382 = vmatpush1.msra.mxu0 0.0
      %383 = vmatprep.subr.mxu0 0.0
      %384 = vmatpush1.msra.mxu0 0.0
      %385 = vmatprep.subr.mxu0 0.0
      %386 = vmatpush1.msra.mxu0 0.0
      %387 = vmatprep.subr.mxu0 0.0
      %388 = vmatpush1.msra.mxu0 0.0
      %389 = vmatprep.subr.mxu0 0.0
      %390 = vmatpush1.msra.mxu0 0.0
      %391 = vmatprep.subr.mxu0 0.0
      %392 = vmatpush1.msra.mxu0 0.0
      %393 = vmatprep.subr.mxu0 0.0
      %394 = vmatpush1.msra.mxu0 0.0
      %395 = vmatprep.subr.mxu0 0.0
      %396 = vmatpush1.msra.mxu0 0.0
      %397 = vmatprep.subr.mxu0 0.0
      %398 = vmatpush1.msra.mxu0 0.0
      %399 = vmatprep.subr.mxu0 0.0
      %400 = vmatpush1.msra.mxu0 0.0
      %401 = vmatprep.subr.mxu0 0.0
      %402 = vmatpush1.msra.mxu0 0.0
      %403 = vmatprep.subr.mxu0 0.0
      %404 = vmatpush1.msra.mxu0 0.0
      %405 = vmatprep.mubr.f32.mxu0 0.0
      %406 = vmatmul.mubr.f32.gmra.mrb[0].mxu0 %v339
      %v407 = vpop.f32.mrb[0].mxu0
      %v408 = vadd.f32 0.0, %v407
      %v409 = vpop.f32.mrb[0].mxu0
      %410 = vdwg.mxu0
      %411 = vst.msk [vmem:[%s243] sm:$0xff] %vm249, %v408
      %v412 = vld [vmem:[%s227] sm:$0xff]
      %v413 = vld [vmem:[%s231] sm:$0xff]
      %v414 = vld [vmem:[%s235] sm:$0xff]
      %416 = vrot.lane.b32.xlu0 %v412, 120
      %v417 = vpop.permute.xlu0 %416
      %419 = vrot.lane.b32.xlu0 %v413, 120
      %v420 = vpop.permute.xlu0 %419
      %v421 = vsel %vm249, %v417, 0
      %v423 = vsel %vm249, %v420, 0
      %425 = vmatprep.subr.mxu0 0.0
      %426 = vmatpush1.xpose.msra.mxu0 %v423
      %427 = vmatprep.subr.mxu0 0.0
      %428 = vmatpush1.xpose.msra.mxu0 0.0
      %429 = vmatprep.subr.mxu0 0.0
      %430 = vmatpush1.xpose.msra.mxu0 0.0
      %431 = vmatprep.subr.mxu0 0.0
      %432 = vmatpush1.xpose.msra.mxu0 0.0
      %433 = vmatprep.subr.mxu0 0.0
      %434 = vmatpush1.xpose.msra.mxu0 0.0
      %435 = vmatprep.subr.mxu0 0.0
      %436 = vmatpush1.xpose.msra.mxu0 0.0
      %437 = vmatprep.subr.mxu0 0.0
      %438 = vmatpush1.xpose.msra.mxu0 0.0
      %439 = vmatprep.subr.mxu0 0.0
      %440 = vmatpush1.xpose.msra.mxu0 0.0
      %441 = vmatprep.subr.mxu0 0.0
      %442 = vmatpush1.xpose.msra.mxu0 0.0
      %443 = vmatprep.subr.mxu0 0.0
      %444 = vmatpush1.xpose.msra.mxu0 0.0
      %445 = vmatprep.subr.mxu0 0.0
      %446 = vmatpush1.xpose.msra.mxu0 0.0
      %447 = vmatprep.subr.mxu0 0.0
      %448 = vmatpush1.xpose.msra.mxu0 0.0
      %449 = vmatprep.subr.mxu0 0.0
      %450 = vmatpush1.xpose.msra.mxu0 0.0
      %451 = vmatprep.subr.mxu0 0.0
      %452 = vmatpush1.xpose.msra.mxu0 0.0
      %453 = vmatprep.subr.mxu0 0.0
      %454 = vmatpush1.xpose.msra.mxu0 0.0
      %455 = vmatprep.subr.mxu0 0.0
      %456 = vmatpush1.xpose.msra.mxu0 0.0
      %457 = vmatprep.subr.mxu0 0.0
      %458 = vmatpush1.xpose.msra.mxu0 0.0
      %459 = vmatprep.subr.mxu0 0.0
      %460 = vmatpush1.xpose.msra.mxu0 0.0
      %461 = vmatprep.subr.mxu0 0.0
      %462 = vmatpush1.xpose.msra.mxu0 0.0
      %463 = vmatprep.subr.mxu0 0.0
      %464 = vmatpush1.xpose.msra.mxu0 0.0
      %465 = vmatprep.subr.mxu0 0.0
      %466 = vmatpush1.xpose.msra.mxu0 0.0
      %467 = vmatprep.subr.mxu0 0.0
      %468 = vmatpush1.xpose.msra.mxu0 0.0
      %469 = vmatprep.subr.mxu0 0.0
      %470 = vmatpush1.xpose.msra.mxu0 0.0
      %471 = vmatprep.subr.mxu0 0.0
      %472 = vmatpush1.xpose.msra.mxu0 0.0
      %473 = vmatprep.subr.mxu0 0.0
      %474 = vmatpush1.xpose.msra.mxu0 0.0
      %475 = vmatprep.subr.mxu0 0.0
      %476 = vmatpush1.xpose.msra.mxu0 0.0
      %477 = vmatprep.subr.mxu0 0.0
      %478 = vmatpush1.xpose.msra.mxu0 0.0
      %479 = vmatprep.subr.mxu0 0.0
      %480 = vmatpush1.xpose.msra.mxu0 0.0
      %481 = vmatprep.subr.mxu0 0.0
      %482 = vmatpush1.xpose.msra.mxu0 0.0
      %483 = vmatprep.subr.mxu0 0.0
      %484 = vmatpush1.xpose.msra.mxu0 0.0
      %485 = vmatprep.subr.mxu0 0.0
      %486 = vmatpush1.xpose.msra.mxu0 0.0
      %487 = vmatprep.subr.mxu0 0.0
      %488 = vmatpush1.xpose.msra.mxu0 0.0
      %489 = vmatprep.mubr.f32.mxu0 0.0
      %490 = vmatmul.mubr.f32.gmra.mrb[0].mxu0 %v421
      %v491 = vpop.f32.mrb[0].mxu0
      %v492 = vadd.f32 0.0, %v491
      %v493 = vpop.f32.mrb[0].mxu0
      %494 = vdwg.mxu0
      %v495 = vsel %vm245, -1.767767e+27, %v492
      %v496 = vsel %vm249, %v495, -inf
      %497 = vmax.xlane.f32.xlu0 %v496
      %v498 = vpop.xlane.xlu0 %497
      %v499 = vsub.f32 %v495, %v498
      %v500 = vmul.f32 %v499, 1.442695
      %v501 = vpow.pop %v500
      %v502 = vsel %vm249, %v501, 0.0
      %503 = vadd.xlane.f32.xlu0 %v502
      %v504 = vpop.xlane.xlu0 %503
      %v505 = vrcp.pop %v504
      %v506 = vmul.f32 %v501, %v505
      %508 = vrot.lane.b32.xlu0 %v414, 120
      %v509 = vpop.permute.xlu0 %508
      %v512 = vsel %vm249, %v506, 0
      %514 = vmatprep.subr.mxu0 0.0
      %515 = vmatpush1.msra.mxu0 %v509
      %516 = vmatprep.subr.mxu0 0.0
      %517 = vmatpush1.msra.mxu0 0.0
      %518 = vmatprep.subr.mxu0 0.0
      %519 = vmatpush1.msra.mxu0 0.0
      %520 = vmatprep.subr.mxu0 0.0
      %521 = vmatpush1.msra.mxu0 0.0
      %522 = vmatprep.subr.mxu0 0.0
      %523 = vmatpush1.msra.mxu0 0.0
      %524 = vmatprep.subr.mxu0 0.0
      %525 = vmatpush1.msra.mxu0 0.0
      %526 = vmatprep.subr.mxu0 0.0
      %527 = vmatpush1.msra.mxu0 0.0
      %528 = vmatprep.subr.mxu0 0.0
      %529 = vmatpush1.msra.mxu0 0.0
      %530 = vmatprep.subr.mxu0 0.0
      %531 = vmatpush1.msra.mxu0 0.0
      %532 = vmatprep.subr.mxu0 0.0
      %533 = vmatpush1.msra.mxu0 0.0
      %534 = vmatprep.subr.mxu0 0.0
      %535 = vmatpush1.msra.mxu0 0.0
      %536 = vmatprep.subr.mxu0 0.0
      %537 = vmatpush1.msra.mxu0 0.0
      %538 = vmatprep.subr.mxu0 0.0
      %539 = vmatpush1.msra.mxu0 0.0
      %540 = vmatprep.subr.mxu0 0.0
      %541 = vmatpush1.msra.mxu0 0.0
      %542 = vmatprep.subr.mxu0 0.0
      %543 = vmatpush1.msra.mxu0 0.0
      %544 = vmatprep.subr.mxu0 0.0
      %545 = vmatpush1.msra.mxu0 0.0
      %546 = vmatprep.subr.mxu0 0.0
      %547 = vmatpush1.msra.mxu0 0.0
      %548 = vmatprep.subr.mxu0 0.0
      %549 = vmatpush1.msra.mxu0 0.0
      %550 = vmatprep.subr.mxu0 0.0
      %551 = vmatpush1.msra.mxu0 0.0
      %552 = vmatprep.subr.mxu0 0.0
      %553 = vmatpush1.msra.mxu0 0.0
      %554 = vmatprep.subr.mxu0 0.0
      %555 = vmatpush1.msra.mxu0 0.0
      %556 = vmatprep.subr.mxu0 0.0
      %557 = vmatpush1.msra.mxu0 0.0
      %558 = vmatprep.subr.mxu0 0.0
      %559 = vmatpush1.msra.mxu0 0.0
      %560 = vmatprep.subr.mxu0 0.0
      %561 = vmatpush1.msra.mxu0 0.0
      %562 = vmatprep.subr.mxu0 0.0
      %563 = vmatpush1.msra.mxu0 0.0
      %564 = vmatprep.subr.mxu0 0.0
      %565 = vmatpush1.msra.mxu0 0.0
      %566 = vmatprep.subr.mxu0 0.0
      %567 = vmatpush1.msra.mxu0 0.0
      %568 = vmatprep.subr.mxu0 0.0
      %569 = vmatpush1.msra.mxu0 0.0
      %570 = vmatprep.subr.mxu0 0.0
      %571 = vmatpush1.msra.mxu0 0.0
      %572 = vmatprep.subr.mxu0 0.0
      %573 = vmatpush1.msra.mxu0 0.0
      %574 = vmatprep.subr.mxu0 0.0
      %575 = vmatpush1.msra.mxu0 0.0
      %576 = vmatprep.subr.mxu0 0.0
      %577 = vmatpush1.msra.mxu0 0.0
      %578 = vmatprep.mubr.f32.mxu0 0.0
      %579 = vmatmul.mubr.f32.gmra.mrb[0].mxu0 %v512
      %v580 = vpop.f32.mrb[0].mxu0
      %v581 = vadd.f32 0.0, %v580
      %v582 = vpop.f32.mrb[0].mxu0
      %583 = vdwg.mxu0
      %585 = vrot.lane.b32.xlu0 %v581, 8
      %v586 = vpop.permute.xlu0 %585
      %vm588 = vcmask 130112
      %589 = vst.msk [vmem:[%s243] sm:$0xff] %vm588, %v586
      %v590 = vld [vmem:[%s227] sm:$0xff]
      %v591 = vld [vmem:[%s231] sm:$0xff]
      %v592 = vld [vmem:[%s235] sm:$0xff]
      %594 = vrot.lane.b32.xlu0 %v590, 112
      %v595 = vpop.permute.xlu0 %594
      %597 = vrot.lane.b32.xlu0 %v591, 112
      %v598 = vpop.permute.xlu0 %597
      %v599 = vsel %vm249, %v595, 0
      %v601 = vsel %vm249, %v598, 0
      %603 = vmatprep.subr.mxu0 0.0
      %604 = vmatpush1.xpose.msra.mxu0 %v601
      %605 = vmatprep.subr.mxu0 0.0
      %606 = vmatpush1.xpose.msra.mxu0 0.0
      %607 = vmatprep.subr.mxu0 0.0
      %608 = vmatpush1.xpose.msra.mxu0 0.0
      %609 = vmatprep.subr.mxu0 0.0
      %610 = vmatpush1.xpose.msra.mxu0 0.0
      %611 = vmatprep.subr.mxu0 0.0
      %612 = vmatpush1.xpose.msra.mxu0 0.0
      %613 = vmatprep.subr.mxu0 0.0
      %614 = vmatpush1.xpose.msra.mxu0 0.0
      %615 = vmatprep.subr.mxu0 0.0
      %616 = vmatpush1.xpose.msra.mxu0 0.0
      %617 = vmatprep.subr.mxu0 0.0
      %618 = vmatpush1.xpose.msra.mxu0 0.0
      %619 = vmatprep.subr.mxu0 0.0
      %620 = vmatpush1.xpose.msra.mxu0 0.0
      %621 = vmatprep.subr.mxu0 0.0
      %622 = vmatpush1.xpose.msra.mxu0 0.0
      %623 = vmatprep.subr.mxu0 0.0
      %624 = vmatpush1.xpose.msra.mxu0 0.0
      %625 = vmatprep.subr.mxu0 0.0
      %626 = vmatpush1.xpose.msra.mxu0 0.0
      %627 = vmatprep.subr.mxu0 0.0
      %628 = vmatpush1.xpose.msra.mxu0 0.0
      %629 = vmatprep.subr.mxu0 0.0
      %630 = vmatpush1.xpose.msra.mxu0 0.0
      %631 = vmatprep.subr.mxu0 0.0
      %632 = vmatpush1.xpose.msra.mxu0 0.0
      %633 = vmatprep.subr.mxu0 0.0
      %634 = vmatpush1.xpose.msra.mxu0 0.0
      %635 = vmatprep.subr.mxu0 0.0
      %636 = vmatpush1.xpose.msra.mxu0 0.0
      %637 = vmatprep.subr.mxu0 0.0
      %638 = vmatpush1.xpose.msra.mxu0 0.0
      %639 = vmatprep.subr.mxu0 0.0
      %640 = vmatpush1.xpose.msra.mxu0 0.0
      %641 = vmatprep.subr.mxu0 0.0
      %642 = vmatpush1.xpose.msra.mxu0 0.0
      %643 = vmatprep.subr.mxu0 0.0
      %644 = vmatpush1.xpose.msra.mxu0 0.0
      %645 = vmatprep.subr.mxu0 0.0
      %646 = vmatpush1.xpose.msra.mxu0 0.0
      %647 = vmatprep.subr.mxu0 0.0
      %648 = vmatpush1.xpose.msra.mxu0 0.0
      %649 = vmatprep.subr.mxu0 0.0
      %650 = vmatpush1.xpose.msra.mxu0 0.0
      %651 = vmatprep.subr.mxu0 0.0
      %652 = vmatpush1.xpose.msra.mxu0 0.0
      %653 = vmatprep.subr.mxu0 0.0
      %654 = vmatpush1.xpose.msra.mxu0 0.0
      %655 = vmatprep.subr.mxu0 0.0
      %656 = vmatpush1.xpose.msra.mxu0 0.0
      %657 = vmatprep.subr.mxu0 0.0
      %658 = vmatpush1.xpose.msra.mxu0 0.0
      %659 = vmatprep.subr.mxu0 0.0
      %660 = vmatpush1.xpose.msra.mxu0 0.0
      %661 = vmatprep.subr.mxu0 0.0
      %662 = vmatpush1.xpose.msra.mxu0 0.0
      %663 = vmatprep.subr.mxu0 0.0
      %664 = vmatpush1.xpose.msra.mxu0 0.0
      %665 = vmatprep.subr.mxu0 0.0
      %666 = vmatpush1.xpose.msra.mxu0 0.0
      %667 = vmatprep.mubr.f32.mxu0 0.0
      %668 = vmatmul.mubr.f32.gmra.mrb[0].mxu0 %v599
      %v669 = vpop.f32.mrb[0].mxu0
      %v670 = vadd.f32 0.0, %v669
      %v671 = vpop.f32.mrb[0].mxu0
      %672 = vdwg.mxu0
      %v673 = vsel %vm245, -1.767767e+27, %v670
      %v674 = vsel %vm249, %v673, -inf
      %675 = vmax.xlane.f32.xlu0 %v674
      %v676 = vpop.xlane.xlu0 %675
      %v677 = vsub.f32 %v673, %v676
      %v678 = vmul.f32 %v677, 1.442695
      %v679 = vpow.pop %v678
      %v680 = vsel %vm249, %v679, 0.0
      %681 = vadd.xlane.f32.xlu0 %v680
      %v682 = vpop.xlane.xlu0 %681
      %v683 = vrcp.pop %v682
      %v684 = vmul.f32 %v679, %v683
      %686 = vrot.lane.b32.xlu0 %v592, 112
      %v687 = vpop.permute.xlu0 %686
      %v690 = vsel %vm249, %v684, 0
      %692 = vmatprep.subr.mxu0 0.0
      %693 = vmatpush1.msra.mxu0 %v687
      %694 = vmatprep.subr.mxu0 0.0
      %695 = vmatpush1.msra.mxu0 0.0
      %696 = vmatprep.subr.mxu0 0.0
      %697 = vmatpush1.msra.mxu0 0.0
      %698 = vmatprep.subr.mxu0 0.0
      %699 = vmatpush1.msra.mxu0 0.0
      %700 = vmatprep.subr.mxu0 0.0
      %701 = vmatpush1.msra.mxu0 0.0
      %702 = vmatprep.subr.mxu0 0.0
      %703 = vmatpush1.msra.mxu0 0.0
      %704 = vmatprep.subr.mxu0 0.0
      %705 = vmatpush1.msra.mxu0 0.0
      %706 = vmatprep.subr.mxu0 0.0
      %707 = vmatpush1.msra.mxu0 0.0
      %708 = vmatprep.subr.mxu0 0.0
      %709 = vmatpush1.msra.mxu0 0.0
      %710 = vmatprep.subr.mxu0 0.0
      %711 = vmatpush1.msra.mxu0 0.0
      %712 = vmatprep.subr.mxu0 0.0
      %713 = vmatpush1.msra.mxu0 0.0
      %714 = vmatprep.subr.mxu0 0.0
      %715 = vmatpush1.msra.mxu0 0.0
      %716 = vmatprep.subr.mxu0 0.0
      %717 = vmatpush1.msra.mxu0 0.0
      %718 = vmatprep.subr.mxu0 0.0
      %719 = vmatpush1.msra.mxu0 0.0
      %720 = vmatprep.subr.mxu0 0.0
      %721 = vmatpush1.msra.mxu0 0.0
      %722 = vmatprep.subr.mxu0 0.0
      %723 = vmatpush1.msra.mxu0 0.0
      %724 = vmatprep.subr.mxu0 0.0
      %725 = vmatpush1.msra.mxu0 0.0
      %726 = vmatprep.subr.mxu0 0.0
      %727 = vmatpush1.msra.mxu0 0.0
      %728 = vmatprep.subr.mxu0 0.0
      %729 = vmatpush1.msra.mxu0 0.0
      %730 = vmatprep.subr.mxu0 0.0
      %731 = vmatpush1.msra.mxu0 0.0
      %732 = vmatprep.subr.mxu0 0.0
      %733 = vmatpush1.msra.mxu0 0.0
      %734 = vmatprep.subr.mxu0 0.0
      %735 = vmatpush1.msra.mxu0 0.0
      %736 = vmatprep.subr.mxu0 0.0
      %737 = vmatpush1.msra.mxu0 0.0
      %738 = vmatprep.subr.mxu0 0.0
      %739 = vmatpush1.msra.mxu0 0.0
      %740 = vmatprep.subr.mxu0 0.0
      %741 = vmatpush1.msra.mxu0 0.0
      %742 = vmatprep.subr.mxu0 0.0
      %743 = vmatpush1.msra.mxu0 0.0
      %744 = vmatprep.subr.mxu0 0.0
      %745 = vmatpush1.msra.mxu0 0.0
      %746 = vmatprep.subr.mxu0 0.0
      %747 = vmatpush1.msra.mxu0 0.0
      %748 = vmatprep.subr.mxu0 0.0
      %749 = vmatpush1.msra.mxu0 0.0
      %750 = vmatprep.subr.mxu0 0.0
      %751 = vmatpush1.msra.mxu0 0.0
      %752 = vmatprep.subr.mxu0 0.0
      %753 = vmatpush1.msra.mxu0 0.0
      %754 = vmatprep.subr.mxu0 0.0
      %755 = vmatpush1.msra.mxu0 0.0
      %756 = vmatprep.mubr.f32.mxu0 0.0
      %757 = vmatmul.mubr.f32.gmra.mrb[0].mxu0 %v690
      %v758 = vpop.f32.mrb[0].mxu0
      %v759 = vadd.f32 0.0, %v758
      %v760 = vpop.f32.mrb[0].mxu0
      %761 = vdwg.mxu0
      %763 = vrot.lane.b32.xlu0 %v759, 16
      %v764 = vpop.permute.xlu0 %763
      %vm766 = vcmask 195712
      %767 = vst.msk [vmem:[%s243] sm:$0xff] %vm766, %v764
      %v768 = vld [vmem:[%s227] sm:$0xff]
      %v769 = vld [vmem:[%s231] sm:$0xff]
      %v770 = vld [vmem:[%s235] sm:$0xff]
      %772 = vrot.lane.b32.xlu0 %v768, 104
      %v773 = vpop.permute.xlu0 %772
      %775 = vrot.lane.b32.xlu0 %v769, 104
      %v776 = vpop.permute.xlu0 %775
      %v777 = vsel %vm249, %v773, 0
      %v779 = vsel %vm249, %v776, 0
      %781 = vmatprep.subr.mxu0 0.0
      %782 = vmatpush1.xpose.msra.mxu0 %v779
      %783 = vmatprep.subr.mxu0 0.0
      %784 = vmatpush1.xpose.msra.mxu0 0.0
      %785 = vmatprep.subr.mxu0 0.0
      %786 = vmatpush1.xpose.msra.mxu0 0.0
      %787 = vmatprep.subr.mxu0 0.0
      %788 = vmatpush1.xpose.msra.mxu0 0.0
      %789 = vmatprep.subr.mxu0 0.0
      %790 = vmatpush1.xpose.msra.mxu0 0.0
      %791 = vmatprep.subr.mxu0 0.0
      %792 = vmatpush1.xpose.msra.mxu0 0.0
      %793 = vmatprep.subr.mxu0 0.0
      %794 = vmatpush1.xpose.msra.mxu0 0.0
      %795 = vmatprep.subr.mxu0 0.0
      %796 = vmatpush1.xpose.msra.mxu0 0.0
      %797 = vmatprep.subr.mxu0 0.0
      %798 = vmatpush1.xpose.msra.mxu0 0.0
      %799 = vmatprep.subr.mxu0 0.0
      %800 = vmatpush1.xpose.msra.mxu0 0.0
      %801 = vmatprep.subr.mxu0 0.0
      %802 = vmatpush1.xpose.msra.mxu0 0.0
      %803 = vmatprep.subr.mxu0 0.0
      %804 = vmatpush1.xpose.msra.mxu0 0.0
      %805 = vmatprep.subr.mxu0 0.0
      %806 = vmatpush1.xpose.msra.mxu0 0.0
      %807 = vmatprep.subr.mxu0 0.0
      %808 = vmatpush1.xpose.msra.mxu0 0.0
      %809 = vmatprep.subr.mxu0 0.0
      %810 = vmatpush1.xpose.msra.mxu0 0.0
      %811 = vmatprep.subr.mxu0 0.0
      %812 = vmatpush1.xpose.msra.mxu0 0.0
      %813 = vmatprep.subr.mxu0 0.0
      %814 = vmatpush1.xpose.msra.mxu0 0.0
      %815 = vmatprep.subr.mxu0 0.0
      %816 = vmatpush1.xpose.msra.mxu0 0.0
      %817 = vmatprep.subr.mxu0 0.0
      %818 = vmatpush1.xpose.msra.mxu0 0.0
      %819 = vmatprep.subr.mxu0 0.0
      %820 = vmatpush1.xpose.msra.mxu0 0.0
      %821 = vmatprep.subr.mxu0 0.0
      %822 = vmatpush1.xpose.msra.mxu0 0.0
      %823 = vmatprep.subr.mxu0 0.0
      %824 = vmatpush1.xpose.msra.mxu0 0.0
      %825 = vmatprep.subr.mxu0 0.0
      %826 = vmatpush1.xpose.msra.mxu0 0.0
      %827 = vmatprep.subr.mxu0 0.0
      %828 = vmatpush1.xpose.msra.mxu0 0.0
      %829 = vmatprep.subr.mxu0 0.0
      %830 = vmatpush1.xpose.msra.mxu0 0.0
      %831 = vmatprep.subr.mxu0 0.0
      %832 = vmatpush1.xpose.msra.mxu0 0.0
      %833 = vmatprep.subr.mxu0 0.0
      %834 = vmatpush1.xpose.msra.mxu0 0.0
      %835 = vmatprep.subr.mxu0 0.0
      %836 = vmatpush1.xpose.msra.mxu0 0.0
      %837 = vmatprep.subr.mxu0 0.0
      %838 = vmatpush1.xpose.msra.mxu0 0.0
      %839 = vmatprep.subr.mxu0 0.0
      %840 = vmatpush1.xpose.msra.mxu0 0.0
      %841 = vmatprep.subr.mxu0 0.0
      %842 = vmatpush1.xpose.msra.mxu0 0.0
      %843 = vmatprep.subr.mxu0 0.0
      %844 = vmatpush1.xpose.msra.mxu0 0.0
      %845 = vmatprep.mubr.f32.mxu0 0.0
      %846 = vmatmul.mubr.f32.gmra.mrb[0].mxu0 %v777
      %v847 = vpop.f32.mrb[0].mxu0
      %v848 = vadd.f32 0.0, %v847
      %v849 = vpop.f32.mrb[0].mxu0
      %850 = vdwg.mxu0
      %v851 = vsel %vm245, -1.767767e+27, %v848
      %v852 = vsel %vm249, %v851, -inf
      %853 = vmax.xlane.f32.xlu0 %v852
      %v854 = vpop.xlane.xlu0 %853
      %v855 = vsub.f32 %v851, %v854
      %v856 = vmul.f32 %v855, 1.442695
      %v857 = vpow.pop %v856
      %v858 = vsel %vm249, %v857, 0.0
      %859 = vadd.xlane.f32.xlu0 %v858
      %v860 = vpop.xlane.xlu0 %859
      %v861 = vrcp.pop %v860
      %v862 = vmul.f32 %v857, %v861
      %864 = vrot.lane.b32.xlu0 %v770, 104
      %v865 = vpop.permute.xlu0 %864
      %v868 = vsel %vm249, %v862, 0
      %870 = vmatprep.subr.mxu0 0.0
      %871 = vmatpush1.msra.mxu0 %v865
      %872 = vmatprep.subr.mxu0 0.0
      %873 = vmatpush1.msra.mxu0 0.0
      %874 = vmatprep.subr.mxu0 0.0
      %875 = vmatpush1.msra.mxu0 0.0
      %876 = vmatprep.subr.mxu0 0.0
      %877 = vmatpush1.msra.mxu0 0.0
      %878 = vmatprep.subr.mxu0 0.0
      %879 = vmatpush1.msra.mxu0 0.0
      %880 = vmatprep.subr.mxu0 0.0
      %881 = vmatpush1.msra.mxu0 0.0
      %882 = vmatprep.subr.mxu0 0.0
      %883 = vmatpush1.msra.mxu0 0.0
      %884 = vmatprep.subr.mxu0 0.0
      %885 = vmatpush1.msra.mxu0 0.0
      %886 = vmatprep.subr.mxu0 0.0
      %887 = vmatpush1.msra.mxu0 0.0
      %888 = vmatprep.subr.mxu0 0.0
      %889 = vmatpush1.msra.mxu0 0.0
      %890 = vmatprep.subr.mxu0 0.0
      %891 = vmatpush1.msra.mxu0 0.0
      %892 = vmatprep.subr.mxu0 0.0
      %893 = vmatpush1.msra.mxu0 0.0
      %894 = vmatprep.subr.mxu0 0.0
      %895 = vmatpush1.msra.mxu0 0.0
      %896 = vmatprep.subr.mxu0 0.0
      %897 = vmatpush1.msra.mxu0 0.0
      %898 = vmatprep.subr.mxu0 0.0
      %899 = vmatpush1.msra.mxu0 0.0
      %900 = vmatprep.subr.mxu0 0.0
      %901 = vmatpush1.msra.mxu0 0.0
      %902 = vmatprep.subr.mxu0 0.0
      %903 = vmatpush1.msra.mxu0 0.0
      %904 = vmatprep.subr.mxu0 0.0
      %905 = vmatpush1.msra.mxu0 0.0
      %906 = vmatprep.subr.mxu0 0.0
      %907 = vmatpush1.msra.mxu0 0.0
      %908 = vmatprep.subr.mxu0 0.0
      %909 = vmatpush1.msra.mxu0 0.0
      %910 = vmatprep.subr.mxu0 0.0
      %911 = vmatpush1.msra.mxu0 0.0
      %912 = vmatprep.subr.mxu0 0.0
      %913 = vmatpush1.msra.mxu0 0.0
      %914 = vmatprep.subr.mxu0 0.0
      %915 = vmatpush1.msra.mxu0 0.0
      %916 = vmatprep.subr.mxu0 0.0
      %917 = vmatpush1.msra.mxu0 0.0
      %918 = vmatprep.subr.mxu0 0.0
      %919 = vmatpush1.msra.mxu0 0.0
      %920 = vmatprep.subr.mxu0 0.0
      %921 = vmatpush1.msra.mxu0 0.0
      %922 = vmatprep.subr.mxu0 0.0
      %923 = vmatpush1.msra.mxu0 0.0
      %924 = vmatprep.subr.mxu0 0.0
      %925 = vmatpush1.msra.mxu0 0.0
      %926 = vmatprep.subr.mxu0 0.0
      %927 = vmatpush1.msra.mxu0 0.0
      %928 = vmatprep.subr.mxu0 0.0
      %929 = vmatpush1.msra.mxu0 0.0
      %930 = vmatprep.subr.mxu0 0.0
      %931 = vmatpush1.msra.mxu0 0.0
      %932 = vmatprep.subr.mxu0 0.0
      %933 = vmatpush1.msra.mxu0 0.0
      %934 = vmatprep.mubr.f32.mxu0 0.0
      %935 = vmatmul.mubr.f32.gmra.mrb[0].mxu0 %v868
      %v936 = vpop.f32.mrb[0].mxu0
      %v937 = vadd.f32 0.0, %v936
      %v938 = vpop.f32.mrb[0].mxu0
      %939 = vdwg.mxu0
      %941 = vrot.lane.b32.xlu0 %v937, 24
      %v942 = vpop.permute.xlu0 %941
      %vm944 = vcmask 261312
      %945 = vst.msk [vmem:[%s243] sm:$0xff] %vm944, %v942
      %p946 = scmp.lt.s32.totalorder %s15, 1
      %s947 = scalar_select %p946, %s15, 1
      %s948 = smul.addr %s947, 8
      %s949 = scalar_lea.vmem %s4, %s948
      // Predicated region
      $region37: #{decoder_forward.26} parent=35 // pred_check
        %p950 = pneg %p137
      $region38: #{decoder_forward.26} parent=35 // pred_check_branch
        %952 = sbr.rel (%p950) target = $region40
      $region39: #{decoder_forward.26} parent=35 // pred_region
        _
      $region40: #{decoder_forward.26} parent=35 // pred_fallthru
        _
    $region36: #{decoder_forward.26} parent=5 // pred_fallthru
      _
    %p953 = scmp.le.s32.totalorder 2, %s10
    // Predicated region
    $region41: #{decoder_forward.26} parent=5 // pred_check
      %p954 = pneg %p953
    $region42: #{decoder_forward.26} parent=5 // pred_check_branch
      %956 = sbr.rel (%p954) target = $region44
    $region43: #{decoder_forward.26} parent=5 // pred_region
      %s957 = ssub.s32 %s10, 2
      // Predicated region
      $region45: #{decoder_forward.26} parent=43 // pred_check
        %p958 = pneg %p143
      $region46: #{decoder_forward.26} parent=43 // pred_check_branch
        %960 = sbr.rel (%p958) target = $region48
      $region47: #{decoder_forward.26} parent=43 // pred_region
        %p961 = scmp.lt.s32.totalorder %s16, 1
        %s962 = scalar_select %p961, %s16, 1
        %s963 = smul.addr %s962, 8
        %s964 = scalar_lea.vmem %s4, %s963
      $region48: #{decoder_forward.26} parent=43 // pred_fallthru
        _
    $region44: #{decoder_forward.26} parent=5 // pred_fallthru
      _
  $region6: #{decoder_forward.26} parent=0 // loop_footer
    %s14 = sadd.s32 1, %s10
  $region7: #{decoder_forward.26} parent=0 // loop_footer_branch
    %9 = sbr.rel target = $region3
  $region8: #{decoder_forward.26} parent=0 // loop_exit
    _

// kernel: decoder_forward.33
$region0: #{decoder_forward.33}
  #allocation0 [shape = 'u32[]', space=smem, size = 0x4, offset = 0x4, fixed_abs, tag = 'smem constant byte address 0x4 - core index']
  #allocation1 [shape = 'u32[144,128]{1,0:T(1,128)}', space=vmem, size = 0x12000, scoped, tag = 'internal scratch']
  %s0 = inlined_call_operand.vmem [shape: f32[16,32], index: 0, kind: input, shape index: {}]
  %s1 = inlined_call_operand.vmem [shape: f32[32,64], index: 1, kind: input, shape index: {}]
  %s2 = inlined_call_operand.vmem [shape: f32[1,64], index: 2, kind: input, shape index: {}]
  %s3 = inlined_call_operand.vmem [shape: f32[64,32], index: 3, kind: input, shape index: {}]
  %s4 = inlined_call_operand.vmem [shape: f32[1,32], index: 4, kind: input, shape index: {}]
  %s5 = inlined_call_operand.vmem [shape: f32[1,32], index: 5, kind: input, shape index: {}]
  %s6 = inlined_call_operand.vmem [shape: f32[1,32], index: 6, kind: input, shape index: {}]
  %s7 = inlined_call_operand.vmem [shape: f32[16,32], index: 7, kind: output, shape index: {}]
  %s8 = sld [smem:[#allocation0]]
  $region38: #{decoder_forward.33} parent=0
    _
  %s10 = ssub.s32 1, %s8
  %s11 = scalar_select 0, %s10, %s8
  // Predicated region
  $region2: #{decoder_forward.33} parent=0 // pred_check
    _
  $region3: #{decoder_forward.33} parent=0 // pred_check_branch
    %13 = sbr.rel (0) target = $region5
  $region4: #{decoder_forward.33} parent=0 // pred_region
    _
  $region5: #{decoder_forward.33} parent=0 // pred_fallthru
    _
  // Predicated region
  $region6: #{decoder_forward.33} parent=0 // pred_check
    _
  $region7: #{decoder_forward.33} parent=0 // pred_check_branch
    %15 = sbr.rel (0) target = $region9
  $region8: #{decoder_forward.33} parent=0 // pred_region
    _
  $region9: #{decoder_forward.33} parent=0 // pred_fallthru
    _
  // Predicated region
  $region10: #{decoder_forward.33} parent=0 // pred_check
    _
  $region11: #{decoder_forward.33} parent=0 // pred_check_branch
    %17 = sbr.rel (0) target = $region13
  $region12: #{decoder_forward.33} parent=0 // pred_region
    _
  $region13: #{decoder_forward.33} parent=0 // pred_fallthru
    _
  // Predicated region
  $region14: #{decoder_forward.33} parent=0 // pred_check
    _
  $region15: #{decoder_forward.33} parent=0 // pred_check_branch
    %19 = sbr.rel (0) target = $region17
  $region16: #{decoder_forward.33} parent=0 // pred_region
    _
  $region17: #{decoder_forward.33} parent=0 // pred_fallthru
    _
  // Predicated region
  $region18: #{decoder_forward.33} parent=0 // pred_check
    _
  $region19: #{decoder_forward.33} parent=0 // pred_check_branch
    %21 = sbr.rel (0) target = $region21
  $region20: #{decoder_forward.33} parent=0 // pred_region
    _
  $region21: #{decoder_forward.33} parent=0 // pred_fallthru
    _
  // Predicated region
  $region22: #{decoder_forward.33} parent=0 // pred_check
    _
  $region23: #{decoder_forward.33} parent=0 // pred_check_branch
    %23 = sbr.rel (0) target = $region25
  $region24: #{decoder_forward.33} parent=0 // pred_region
    _
  $region25: #{decoder_forward.33} parent=0 // pred_fallthru
    _
  // Predicated region
  $region26: #{decoder_forward.33} parent=0 // pred_check
    _
  $region27: #{decoder_forward.33} parent=0 // pred_check_branch
    %25 = sbr.rel (0) target = $region29
  $region28: #{decoder_forward.33} parent=0 // pred_region
    _
  $region29: #{decoder_forward.33} parent=0 // pred_fallthru
    _
  %v26 = vld [vmem:[%s0] sm:$0xff]
  %v27 = vld [vmem:[%s0 + $0x8] sm:$0xff]
  %v28 = vld [vmem:[%s1] sm:$0xff]
  %v29 = vld [vmem:[%s1 + $0x8] sm:$0xff]
  %v30 = vld [vmem:[%s1 + $0x10] sm:$0xff]
  %v31 = vld [vmem:[%s1 + $0x18] sm:$0xff]
  %v32 = vld [vmem:[%s2] sm:$0x1]
  %v34 = vlaneseq
  %v35 = vshrl.u32 %v34, 7
  %v36 = vsub.s32 0, %v35
  %v37 = vrot.slane %v32, %v36
  %vm39 = vcmask 261120
  %v41 = vsel %vm39, %v26, 0
  %v44 = vsel %vm39, %v27, 0
  %46 = vmatprep.subr.mxu0 0.0
  %47 = vmatpush1.msra.mxu0 %v28
  %48 = vmatprep.subr.mxu0 0.0
  %49 = vmatpush1.msra.mxu0 %v29
  %50 = vmatprep.subr.mxu0 0.0
  %51 = vmatpush1.msra.mxu0 %v30
  %52 = vmatprep.subr.mxu0 0.0
  %53 = vmatpush1.msra.mxu0 %v31
  %54 = vmatprep.subr.mxu0 0.0
  %55 = vmatpush1.msra.mxu0 0.0
  %56 = vmatprep.subr.mxu0 0.0
  %57 = vmatpush1.msra.mxu0 0.0
  %58 = vmatprep.subr.mxu0 0.0
  %59 = vmatpush1.msra.mxu0 0.0
  %60 = vmatprep.subr.mxu0 0.0
  %61 = vmatpush1.msra.mxu0 0.0
  %62 = vmatprep.subr.mxu0 0.0
  %63 = vmatpush1.msra.mxu0 0.0
  %64 = vmatprep.subr.mxu0 0.0
  %65 = vmatpush1.msra.mxu0 0.0
  %66 = vmatprep.subr.mxu0 0.0
  %67 = vmatpush1.msra.mxu0 0.0
  %68 = vmatprep.subr.mxu0 0.0
  %69 = vmatpush1.msra.mxu0 0.0
  %70 = vmatprep.subr.mxu0 0.0
  %71 = vmatpush1.msra.mxu0 0.0
  %72 = vmatprep.subr.mxu0 0.0
  %73 = vmatpush1.msra.mxu0 0.0
  %74 = vmatprep.subr.mxu0 0.0
  %75 = vmatpush1.msra.mxu0 0.0
  %76 = vmatprep.subr.mxu0 0.0
  %77 = vmatpush1.msra.mxu0 0.0
  %78 = vmatprep.subr.mxu0 0.0
  %79 = vmatpush1.msra.mxu0 0.0
  %80 = vmatprep.subr.mxu0 0.0
  %81 = vmatpush1.msra.mxu0 0.0
  %82 = vmatprep.subr.mxu0 0.0
  %83 = vmatpush1.msra.mxu0 0.0
  %84 = vmatprep.subr.mxu0 0.0
  %85 = vmatpush1.msra.mxu0 0.0
  %86 = vmatprep.subr.mxu0 0.0
  %87 = vmatpush1.msra.mxu0 0.0
  %88 = vmatprep.subr.mxu0 0.0
  %89 = vmatpush1.msra.mxu0 0.0
  %90 = vmatprep.subr.mxu0 0.0
  %91 = vmatpush1.msra.mxu0 0.0
  %92 = vmatprep.subr.mxu0 0.0
  %93 = vmatpush1.msra.mxu0 0.0
  %94 = vmatprep.subr.mxu0 0.0
  %95 = vmatpush1.msra.mxu0 0.0
  %96 = vmatprep.subr.mxu0 0.0
  %97 = vmatpush1.msra.mxu0 0.0
  %98 = vmatprep.subr.mxu0 0.0
  %99 = vmatpush1.msra.mxu0 0.0
  %100 = vmatprep.subr.mxu0 0.0
  %101 = vmatpush1.msra.mxu0 0.0
  %102 = vmatprep.subr.mxu0 0.0
  %103 = vmatpush1.msra.mxu0 0.0
  %104 = vmatprep.subr.mxu0 0.0
  %105 = vmatpush1.msra.mxu0 0.0
  %106 = vmatprep.subr.mxu0 0.0
  %107 = vmatpush1.msra.mxu0 0.0
  %108 = vmatprep.subr.mxu0 0.0
  %109 = vmatpush1.msra.mxu0 0.0
  %110 = vmatprep.mubr.f32.mxu0 0.0
  %111 = vmatmul.mubr.f32.gmra.mrb[0].mxu0 %v41
  %v112 = vpop.f32.mrb[0].mxu0
  %v113 = vadd.f32 %v37, %v112
  %v114 = vpop.f32.mrb[0].mxu0
  %115 = vmatprep.mubr.f32.mxu0 0.0
  %116 = vmatmul.mubr.f32.gmra.mrb[0].mxu0 %v44
  %v117 = vpop.f32.mrb[0].mxu0
  %v118 = vadd.f32 %v37, %v117
  %v119 = vpop.f32.mrb[0].mxu0
  %120 = vdwg.mxu0
  %v121 = vmax.f32 %v113, 0.0
  %v122 = vmax.f32 %v118, 0.0
  %v123 = vld [vmem:[%s3] sm:$0xff]
  %v124 = vld [vmem:[%s3 + $0x8] sm:$0xff]
  %v125 = vld [vmem:[%s3 + $0x10] sm:$0xff]
  %v126 = vld [vmem:[%s3 + $0x18] sm:$0xff]
  %v127 = vld [vmem:[%s3 + $0x20] sm:$0xff]
  %v128 = vld [vmem:[%s3 + $0x28] sm:$0xff]
  %v129 = vld [vmem:[%s3 + $0x30] sm:$0xff]
  %v130 = vld [vmem:[%s3 + $0x38] sm:$0xff]
  %v131 = vld [vmem:[%s4] sm:$0x1]
  %v133 = vlaneseq
  %v134 = vshrl.u32 %v133, 7
  %v135 = vsub.s32 0, %v134
  %v136 = vrot.slane %v131, %v135
  %vm138 = vcmask 523264
  %v140 = vsel %vm138, %v121, 0
  %v143 = vsel %vm138, %v122, 0
  %145 = vmatprep.subr.mxu0 0.0
  %146 = vmatpush1.msra.mxu0 %v123
  %147 = vmatprep.subr.mxu0 0.0
  %148 = vmatpush1.msra.mxu0 %v124
  %149 = vmatprep.subr.mxu0 0.0
  %150 = vmatpush1.msra.mxu0 %v125
  %151 = vmatprep.subr.mxu0 0.0
  %152 = vmatpush1.msra.mxu0 %v126
  %153 = vmatprep.subr.mxu0 0.0
  %154 = vmatpush1.msra.mxu0 %v127
  %155 = vmatprep.subr.mxu0 0.0
  %156 = vmatpush1.msra.mxu0 %v128
  %157 = vmatprep.subr.mxu0 0.0
  %158 = vmatpush1.msra.mxu0 %v129
  %159 = vmatprep.subr.mxu0 0.0
  %160 = vmatpush1.msra.mxu0 %v130
  %161 = vmatprep.subr.mxu0 0.0
  %162 = vmatpush1.msra.mxu0 0.0
  %163 = vmatprep.subr.mxu0 0.0
  %164 = vmatpush1.msra.mxu0 0.0
  %165 = vmatprep.subr.mxu0 0.0
  %166 = vmatpush1.msra.mxu0 0.0
  %167 = vmatprep.subr.mxu0 0.0
  %168 = vmatpush1.msra.mxu0 0.0
  %169 = vmatprep.subr.mxu0 0.0
  %170 = vmatpush1.msra.mxu0 0.0
  %171 = vmatprep.subr.mxu0 0.0
  %172 = vmatpush1.msra.mxu0 0.0
  %173 = vmatprep.subr.mxu0 0.0
  %174 = vmatpush1.msra.mxu0 0.0
  %175 = vmatprep.subr.mxu0 0.0
  %176 = vmatpush1.msra.mxu0 0.0
  %177 = vmatprep.subr.mxu0 0.0
  %178 = vmatpush1.msra.mxu0 0.0
  %179 = vmatprep.subr.mxu0 0.0
  %180 = vmatpush1.msra.mxu0 0.0
  %181 = vmatprep.subr.mxu0 0.0
  %182 = vmatpush1.msra.mxu0 0.0
  %183 = vmatprep.subr.mxu0 0.0
  %184 = vmatpush1.msra.mxu0 0.0
  %185 = vmatprep.subr.mxu0 0.0
  %186 = vmatpush1.msra.mxu0 0.0
  %187 = vmatprep.subr.mxu0 0.0
  %188 = vmatpush1.msra.mxu0 0.0
  %189 = vmatprep.subr.mxu0 0.0
  %190 = vmatpush1.msra.mxu0 0.0
  %191 = vmatprep.subr.mxu0 0.0
  %192 = vmatpush1.msra.mxu0 0.0
  %193 = vmatprep.subr.mxu0 0.0
  %194 = vmatpush1.msra.mxu0 0.0
  %195 = vmatprep.subr.mxu0 0.0
  %196 = vmatpush1.msra.mxu0 0.0
  %197 = vmatprep.subr.mxu0 0.0
  %198 = vmatpush1.msra.mxu0 0.0
  %199 = vmatprep.subr.mxu0 0.0
  %200 = vmatpush1.msra.mxu0 0.0
  %201 = vmatprep.subr.mxu0 0.0
  %202 = vmatpush1.msra.mxu0 0.0
  %203 = vmatprep.subr.mxu0 0.0
  %204 = vmatpush1.msra.mxu0 0.0
  %205 = vmatprep.subr.mxu0 0.0
  %206 = vmatpush1.msra.mxu0 0.0
  %207 = vmatprep.subr.mxu0 0.0
  %208 = vmatpush1.msra.mxu0 0.0
  %209 = vmatprep.mubr.f32.mxu0 0.0
  %210 = vmatmul.mubr.f32.gmra.mrb[0].mxu0 %v140
  %v211 = vpop.f32.mrb[0].mxu0
  %v212 = vadd.f32 %v136, %v211
  %v213 = vpop.f32.mrb[0].mxu0
  %214 = vmatprep.mubr.f32.mxu0 0.0
  %215 = vmatmul.mubr.f32.gmra.mrb[0].mxu0 %v143
  %v216 = vpop.f32.mrb[0].mxu0
  %v217 = vadd.f32 %v136, %v216
  %v218 = vpop.f32.mrb[0].mxu0
  %219 = vdwg.mxu0
  %v220 = vadd.f32 %v212, %v26
  %v221 = vadd.f32 %v217, %v27
  %v222 = vsel %vm39, %v220, 0.0
  %223 = vadd.xlane.f32.xlu0 %v222
  %v224 = vpop.xlane.xlu0 %223
  %v225 = vsel %vm39, %v221, 0.0
  %226 = vadd.xlane.f32.xlu0 %v225
  %v227 = vpop.xlane.xlu0 %226
  %v228 = vrcp.pop 32.0
  %v229 = vmul.f32 %v224, %v228
  %v230 = vmul.f32 %v227, %v228
  %v231 = vsub.f32 %v220, %v229
  %v232 = vsub.f32 %v221, %v230
  %v233 = vmul.f32 %v231, %v231
  %v234 = vmul.f32 %v232, %v232
  %v235 = vsel %vm39, %v233, 0.0
  %236 = vadd.xlane.f32.xlu0 %v235
  %v237 = vpop.xlane.xlu0 %236
  %v238 = vsel %vm39, %v234, 0.0
  %239 = vadd.xlane.f32.xlu0 %v238
  %v240 = vpop.xlane.xlu0 %239
  %v241 = vmul.f32 %v237, %v228
  %v242 = vmul.f32 %v240, %v228
  %v243 = vadd.f32 %v241, 1e-05
  %v244 = vadd.f32 %v242, 1e-05
  %v245 = vrsqrt.pop %v243
  %v246 = vrsqrt.pop %v244
  %v247 = vmul.f32 %v231, %v245
  %v248 = vmul.f32 %v232, %v246
  %v249 = vld [vmem:[%s5] sm:$0x1]
  %v251 = vlaneseq
  %v252 = vshrl.u32 %v251, 7
  %v253 = vsub.s32 0, %v252
  %v254 = vrot.slane %v249, %v253
  %v256 = vmul.f32 %v247, %v254
  %v257 = vmul.f32 %v248, %v254
  %v258 = vld [vmem:[%s6] sm:$0x1]
  %v260 = vlaneseq
  %v261 = vshrl.u32 %v260, 7
  %v262 = vsub.s32 0, %v261
  %v263 = vrot.slane %v258, %v262
  %v265 = vadd.f32 %v256, %v263
  %v266 = vadd.f32 %v257, %v263
  %267 = vst.msk [vmem:[%s7] sm:$0xff] %vm39, %v265
  %268 = vst.msk [vmem:[%s7 + $0x8] sm:$0xff] %vm39, %v266
  // Predicated region
  $region30: #{decoder_forward.33} parent=0 // pred_check
    _
  $region31: #{decoder_forward.33} parent=0 // pred_check_branch
    %270 = sbr.rel (0) target = $region33
  $region32: #{decoder_forward.33} parent=0 // pred_region
    _
  $region33: #{decoder_forward.33} parent=0 // pred_fallthru
    _
  // Predicated region
  $region34: #{decoder_forward.33} parent=0 // pred_check
    _
  $region35: #{decoder_forward.33} parent=0 // pred_check_branch
    %272 = sbr.rel (0) target = $region37
  $region36: #{decoder_forward.33} parent=0 // pred_region
    _
  $region37: #{decoder_forward.33} parent=0 // pred_fallthru
    _

// kernel: decoder_forward.45
$region0: #{decoder_forward.45}
  #allocation0 [shape = 'u32[]', space=smem, size = 0x4, offset = 0x4, fixed_abs, tag = 'smem constant byte address 0x4 - core index']
  #allocation1 [shape = 'u32[144,128]{1,0:T(1,128)}', space=vmem, size = 0x12000, scoped, tag = 'internal scratch']
  #allocation2 [shape = 'f32[16,128]{1,0:T(8,128)}', space=vmem, size = 0x2000, scoped, tag = 'scratch operand']
  %s0 = inlined_call_operand.vmem [shape: f32[16,32], index: 0, kind: input, shape index: {}]
  %s1 = inlined_call_operand.vmem [shape: f32[32,128], index: 1, kind: input, shape index: {}]
  %s2 = inlined_call_operand.vmem [shape: f32[1,128], index: 2, kind: input, shape index: {}]
  %s3 = inlined_call_operand.hbm [shape: f32[16,128], index: 3, kind: output, shape index: {}]
  %s4 = sld [smem:[#allocation0]]
  $region30: #{decoder_forward.45} parent=0
    _
  %s6 = ssub.s32 1, %s4
  %s7 = scalar_select 0, %s6, %s4
  $region1: #{decoder_forward.45} parent=0
    #allocation3 [shape = 'u8[8192]{0}', space=vmem, size = 0x2000, scoped, tag = 'output window, operand 0, single buffered']
    #allocation4 [shape = 's32[1]{0}', space=sflag, size = 0x4, scoped, tag = 'scoped memory for decoder_forward.45']
    %8 = vsyncpa [#allocation4], 0
    // Predicated region
    $region2: #{decoder_forward.45} parent=1 // pred_check
      _
    $region3: #{decoder_forward.45} parent=1 // pred_check_branch
      %10 = sbr.rel (0) target = $region5
    $region4: #{decoder_forward.45} parent=1 // pred_region
      _
    $region5: #{decoder_forward.45} parent=1 // pred_fallthru
      _
    // Predicated region
    $region6: #{decoder_forward.45} parent=1 // pred_check
      _
    $region7: #{decoder_forward.45} parent=1 // pred_check_branch
      %12 = sbr.rel (0) target = $region9
    $region8: #{decoder_forward.45} parent=1 // pred_region
      _
    $region9: #{decoder_forward.45} parent=1 // pred_fallthru
      _
    // Predicated region
    $region10: #{decoder_forward.45} parent=1 // pred_check
      _
    $region11: #{decoder_forward.45} parent=1 // pred_check_branch
      %14 = sbr.rel (0) target = $region13
    $region12: #{decoder_forward.45} parent=1 // pred_region
      _
    $region13: #{decoder_forward.45} parent=1 // pred_fallthru
      _
    %p15 = scmp.eq.s32.totalorder 0, 0
    // Predicated region
    $region14: #{decoder_forward.45} parent=1 // pred_check
      %p16 = pneg %p15
    $region15: #{decoder_forward.45} parent=1 // pred_check_branch
      %18 = sbr.rel (%p16) target = $region17
    $region16: #{decoder_forward.45} parent=1 // pred_region
      %19 = vst [vmem:[#allocation2] sm:$0xff] 0.0
      %20 = vst [vmem:[#allocation2 + $0x8] sm:$0xff] 0.0
    $region17: #{decoder_forward.45} parent=1 // pred_fallthru
      _
    %v21 = vld [vmem:[#allocation2] sm:$0xff]
    %v22 = vld [vmem:[#allocation2 + $0x8] sm:$0xff]
    %v23 = vld [vmem:[%s0] sm:$0xff]
    %v24 = vld [vmem:[%s0 + $0x8] sm:$0xff]
    %v25 = vld [vmem:[%s1] sm:$0xff]
    %v26 = vld [vmem:[%s1 + $0x8] sm:$0xff]
    %v27 = vld [vmem:[%s1 + $0x10] sm:$0xff]
    %v28 = vld [vmem:[%s1 + $0x18] sm:$0xff]
    %vm29 = vcmask 261120
    %v31 = vsel %vm29, %v23, 0
    %v34 = vsel %vm29, %v24, 0
    %36 = vmatprep.subr.mxu0 0.0
    %37 = vmatpush1.msra.mxu0 %v25
    %38 = vmatprep.subr.mxu0 0.0
    %39 = vmatpush1.msra.mxu0 %v26
    %40 = vmatprep.subr.mxu0 0.0
    %41 = vmatpush1.msra.mxu0 %v27
    %42 = vmatprep.subr.mxu0 0.0
    %43 = vmatpush1.msra.mxu0 %v28
    %44 = vmatprep.subr.mxu0 0.0
    %45 = vmatpush1.msra.mxu0 0.0
    %46 = vmatprep.subr.mxu0 0.0
    %47 = vmatpush1.msra.mxu0 0.0
    %48 = vmatprep.subr.mxu0 0.0
    %49 = vmatpush1.msra.mxu0 0.0
    %50 = vmatprep.subr.mxu0 0.0
    %51 = vmatpush1.msra.mxu0 0.0
    %52 = vmatprep.subr.mxu0 0.0
    %53 = vmatpush1.msra.mxu0 0.0
    %54 = vmatprep.subr.mxu0 0.0
    %55 = vmatpush1.msra.mxu0 0.0
    %56 = vmatprep.subr.mxu0 0.0
    %57 = vmatpush1.msra.mxu0 0.0
    %58 = vmatprep.subr.mxu0 0.0
    %59 = vmatpush1.msra.mxu0 0.0
    %60 = vmatprep.subr.mxu0 0.0
    %61 = vmatpush1.msra.mxu0 0.0
    %62 = vmatprep.subr.mxu0 0.0
    %63 = vmatpush1.msra.mxu0 0.0
    %64 = vmatprep.subr.mxu0 0.0
    %65 = vmatpush1.msra.mxu0 0.0
    %66 = vmatprep.subr.mxu0 0.0
    %67 = vmatpush1.msra.mxu0 0.0
    %68 = vmatprep.subr.mxu0 0.0
    %69 = vmatpush1.msra.mxu0 0.0
    %70 = vmatprep.subr.mxu0 0.0
    %71 = vmatpush1.msra.mxu0 0.0
    %72 = vmatprep.subr.mxu0 0.0
    %73 = vmatpush1.msra.mxu0 0.0
    %74 = vmatprep.subr.mxu0 0.0
    %75 = vmatpush1.msra.mxu0 0.0
    %76 = vmatprep.subr.mxu0 0.0
    %77 = vmatpush1.msra.mxu0 0.0
    %78 = vmatprep.subr.mxu0 0.0
    %79 = vmatpush1.msra.mxu0 0.0
    %80 = vmatprep.subr.mxu0 0.0
    %81 = vmatpush1.msra.mxu0 0.0
    %82 = vmatprep.subr.mxu0 0.0
    %83 = vmatpush1.msra.mxu0 0.0
    %84 = vmatprep.subr.mxu0 0.0
    %85 = vmatpush1.msra.mxu0 0.0
    %86 = vmatprep.subr.mxu0 0.0
    %87 = vmatpush1.msra.mxu0 0.0
    %88 = vmatprep.subr.mxu0 0.0
    %89 = vmatpush1.msra.mxu0 0.0
    %90 = vmatprep.subr.mxu0 0.0
    %91 = vmatpush1.msra.mxu0 0.0
    %92 = vmatprep.subr.mxu0 0.0
    %93 = vmatpush1.msra.mxu0 0.0
    %94 = vmatprep.subr.mxu0 0.0
    %95 = vmatpush1.msra.mxu0 0.0
    %96 = vmatprep.subr.mxu0 0.0
    %97 = vmatpush1.msra.mxu0 0.0
    %98 = vmatprep.subr.mxu0 0.0
    %99 = vmatpush1.msra.mxu0 0.0
    %100 = vmatprep.mubr.f32.mxu0 0.0
    %101 = vmatmul.mubr.f32.gmra.mrb[0].mxu0 %v31
    %v102 = vpop.f32.mrb[0].mxu0
    %v103 = vadd.f32 0.0, %v102
    %v104 = vpop.f32.mrb[0].mxu0
    %105 = vmatprep.mubr.f32.mxu0 0.0
    %106 = vmatmul.mubr.f32.gmra.mrb[0].mxu0 %v34
    %v107 = vpop.f32.mrb[0].mxu0
    %v108 = vadd.f32 0.0, %v107
    %v109 = vpop.f32.mrb[0].mxu0
    %110 = vdwg.mxu0
    %v111 = vadd.f32 %v21, %v103
    %v112 = vadd.f32 %v22, %v108
    %113 = vst [vmem:[#allocation2] sm:$0xff] %v111
    %114 = vst [vmem:[#allocation2 + $0x8] sm:$0xff] %v112
    // Predicated region
    $region18: #{decoder_forward.45} parent=1 // pred_check
      %p115 = pneg %p15
    $region19: #{decoder_forward.45} parent=1 // pred_check_branch
      %117 = sbr.rel (%p115) target = $region21
    $region20: #{decoder_forward.45} parent=1 // pred_region
      %v118 = vld [vmem:[#allocation2] sm:$0xff]
      %v119 = vld [vmem:[#allocation2 + $0x8] sm:$0xff]
      %v120 = vld [vmem:[%s2] sm:$0x1]
      %v122 = vlaneseq
      %v123 = vshrl.u32 %v122, 7
      %v124 = vsub.s32 0, %v123
      %v125 = vrot.slane %v120, %v124
      %v127 = vadd.f32 %v118, %v125
      %v128 = vadd.f32 %v119, %v125
      %129 = vst [vmem:[#allocation3] sm:$0xff] %v127
      %130 = vst [vmem:[#allocation3 + $0x8] sm:$0xff] %v128
    $region21: #{decoder_forward.45} parent=1 // pred_fallthru
      _
    // Predicated region
    $region22: #{decoder_forward.45} parent=1 // pred_check
      _
    $region23: #{decoder_forward.45} parent=1 // pred_check_branch
      %132 = sbr.rel (0) target = $region25
    $region24: #{decoder_forward.45} parent=1 // pred_region
      %s134 = ssub.s32 256, 256
      %135 = vsyncadd [#allocation4], %s134
      %s136 = sshll.u32 [#allocation3], 4
      %s137 = int_to_ptr.vmem [resolvable:$true] %s136
      %142 = dma.vmem_to_hbm [thread:$0]  %s137, 256, %s3, [#allocation4], 128, 128, 8
    $region25: #{decoder_forward.45} parent=1 // pred_fallthru
      _
    // Predicated region
    $region26: #{decoder_forward.45} parent=1 // pred_check
      _
    $region27: #{decoder_forward.45} parent=1 // pred_check_branch
      %144 = sbr.rel (0) target = $region29
    $region28: #{decoder_forward.45} parent=1 // pred_region
      %145 = dma.done [#allocation4], 256
    $region29: #{decoder_forward.45} parent=1 // pred_fallthru
      _
    %146 = vsyncpa [#allocation4], 1

</llo_original>
